<compile_context>
chip_gen: v7x
topology: tpu7x:2x2x1
jax: 0.10.0
libtpu: 0.0.40
codegen_flags: <defaults>
</compile_context>

<pallas_src>
import jax
import jax.numpy as jnp
from jax import lax
from jax.experimental import pallas as pl
from jax.experimental.pallas import tpu as pltpu

EMBED_DIM = 64
HIDDEN = 64
I_NUM = 1536
C_NUM = 2
FEAT = I_NUM + C_NUM          # 1538
BN_EPS = 1e-5
BN_SCALE = (1.0 + BN_EPS) ** -0.5
LANE = 128
MAX_TILE_B = 1024             # batch tile rows (multiple of 16 for bf16 sublane tiling)


def _dot(a, b):
    return jnp.dot(a, b, preferred_element_type=jnp.float32)


def _round_up(n, m):
    return ((n + m - 1) // m) * m


def _vmem_capacity_bytes():
    try:
        return int(pltpu.get_tpu_info().vmem_capacity_bytes)
    except Exception:
        return 64 << 20       # conservative (v7x per-TC) fallback


# Raise the stage-2 scoped VMEM limit on 128 MiB parts (v5e/v6e) but stay well
# under v7x's 64 MiB physical ceiling.
_STAGE2_VMEM_LIMIT = int(min(_vmem_capacity_bytes() * 3 // 4, 96 << 20))


# ----------------------------------------------------------------------------------
# Stage 1: per-row field-interaction pooling + first-order FM term (batch tiled).
# ----------------------------------------------------------------------------------
def stage1_kernel(xd_ref, cat_ref, we_ref, w2_ref, consts_ref, packed_ref):
    x = xd_ref[...]                                   # (TB, 1536) bf16
    cat = cat_ref[...]                                # (TB, 2)    f32
    ca = cat[:, 0:1]
    cm = cat[:, 1:2]

    consts = consts_ref[...]                          # (8, 128)   f32
    b_ea = consts[0:1, :]                             # [bda | zeros] (lane 64 = 0)
    b_em = consts[1:2, :]                             # [bdm | zeros]
    hca0 = consts[2:3, :HIDDEN]
    hcm0 = consts[3:4, :HIDDEN]
    fv_da = consts[4:5, :HIDDEN]
    fv_dm = consts[5:6, :HIDDEN]
    fv_ca = consts[6:7, :HIDDEN]
    fv_cm = consts[7:8, :HIDDEN]
    w_fm_ca = consts[6:7, HIDDEN:HIDDEN + 1]          # fm_linear weight for CA feature
    w_fm_cm = consts[7:8, HIDDEN:HIDDEN + 1]          # fm_linear weight for CM feature

    # Extended dense-field embeddings (bf16 on the MXU, f32 accumulate):
    #   cols 0:64 -> inter_DA / inter_DM (Linear 768->64 incl. bias)
    #   col  64   -> folded first-order FM contribution of that x half
    ea = _dot(x[:, :768], we_ref[0]) + b_ea           # (TB, 128) f32
    em = _dot(x[:, 768:], we_ref[1]) + b_em           # (TB, 128) f32

    # Packed second-level matmuls:
    #   pa/pm cols 0:64 = inter @ hidden_X, col 64 = sum over embed dim (ones column)
    #   sq    cols 0:64 = inter^2 @ hidden_X^2 summed over the two dense fields
    pa = _dot(ea, w2_ref[0])
    pm = _dot(em, w2_ref[1])
    sq = _dot(ea * ea, w2_ref[2]) + _dot(em * em, w2_ref[3])

    sum_a_da = pa[:, :HIDDEN]
    sum_a_dm = pm[:, :HIDDEN]
    sum_b_da = pa[:, HIDDEN:HIDDEN + 1]
    sum_b_dm = pm[:, HIDDEN:HIDDEN + 1]
    sq_sum = sq[:, :HIDDEN]

    # BiInteractionPooling over the DA and DM hide tensors
    bi_sum = 0.5 * (sum_a_da * sum_a_da + sum_a_dm * sum_a_dm - sq_sum)

    # Different_Field_Inter over ordered field pairs A != B, factored as
    # S_total * T_total - diag (algebraically identical to the 12-term sum).
    sum_a_ca = ca * hca0
    sum_a_cm = cm * hcm0
    t_da = fv_da * sum_b_da
    t_dm = fv_dm * sum_b_dm
    t_ca = fv_ca * ca
    t_cm = fv_cm * cm
    t_total = t_da + t_dm + t_ca + t_cm
    s_total = sum_a_da + sum_a_dm + sum_a_ca + sum_a_cm
    diag = sum_a_da * t_da + sum_a_dm * t_dm + sum_a_ca * t_ca + sum_a_cm * t_cm
    pooled = bi_sum + s_total * t_total - diag                     # (TB, 64)

    # First-order FM term: dense part from the folded column, categorical part from
    # the two scalar weights (fm bias is folded into the stage-2 bias).
    fm = (ea[:, HIDDEN:HIDDEN + 1] + em[:, HIDDEN:HIDDEN + 1]
          + ca * w_fm_ca + cm * w_fm_cm)                           # (TB, 1)

    # Single lane-dense (TB, 128) writeback: [pooled | fm broadcast over 64 lanes].
    fm_bcast = jnp.broadcast_to(fm, (pooled.shape[0], HIDDEN))
    packed_ref[...] = jnp.concatenate([pooled, fm_bcast], axis=1)


# ----------------------------------------------------------------------------------
# Stage 2: whole-batch self-attention + MLP head (small, un-gridded).
# ----------------------------------------------------------------------------------
def stage2_kernel(packed_ref, qkv_ref, h1w_ref, h1b_ref, h2wt_ref, bias_ref, out_ref):
    packed = packed_ref[...]                                   # (B, 128)
    pooled = packed[:, :HIDDEN]                                # (B, 64)
    fm = packed[:, HIDDEN:HIDDEN + 1]                          # (B, 1)

    # q/k/v projections packed into one (64, 192) bf16 matmul
    proj = _dot(pooled.astype(jnp.bfloat16), qkv_ref[...])     # (B, 192) f32
    pq = proj[:, :HIDDEN].astype(jnp.bfloat16)
    pk = proj[:, HIDDEN:2 * HIDDEN].astype(jnp.bfloat16)
    pv = proj[:, 2 * HIDDEN:].astype(jnp.bfloat16)

    # Whole-batch softmax attention (matches the PyTorch module).
    # TODO(synk): flash-style query-tiled online softmax for very large B.
    s = lax.dot_general(pq, pk, (((1,), (1,)), ((), ())),
                        preferred_element_type=jnp.float32)    # (B, B)
    s = s - jnp.max(s, axis=-1, keepdims=True)
    e = jnp.exp(s)
    attn = e / jnp.sum(e, axis=-1, keepdims=True)
    vws = _dot(attn.astype(jnp.bfloat16), pv)                  # (B, 64) f32

    # hidden_1 + BatchNorm (eval, init stats) folded into h1w/h1b; dropout = identity
    h1 = jnp.maximum(_dot(vws, h1w_ref[...]) + h1b_ref[...], 0.0)
    mlp = jnp.sum(h1 * h2wt_ref[...], axis=-1, keepdims=True)  # (B, 1)
    out = fm + mlp + bias_ref[...]
    out_ref[...] = 1.0 / (1.0 + jnp.exp(-out))                 # sigmoid


# ----------------------------------------------------------------------------------
# Host-side parameter folding / packing.
# ----------------------------------------------------------------------------------
def _prepare(params):
    f32 = jnp.float32

    # extended embedding weights: cols 0:64 = wda/wdm, col 64 = matching half of fm_w
    w_ea = jnp.zeros((768, LANE), f32)
    w_ea = w_ea.at[:, :EMBED_DIM].set(params["wda"])
    w_ea = w_ea.at[:, EMBED_DIM].set(params["fm_w"][:768, 0])
    w_em = jnp.zeros((768, LANE), f32)
    w_em = w_em.at[:, :EMBED_DIM].set(params["wdm"])
    w_em = w_em.at[:, EMBED_DIM].set(params["fm_w"][768:I_NUM, 0])
    w_e = jnp.stack([w_ea, w_em]).astype(jnp.bfloat16)          # (2, 768, 128)

    def lvl2_sum(h):
        w = jnp.zeros((LANE, LANE), f32)
        w = w.at[:EMBED_DIM, :HIDDEN].set(h)
        w = w.at[:EMBED_DIM, HIDDEN].set(1.0)                    # ones column -> sum_b
        return w

    def lvl2_sq(h):
        return jnp.zeros((LANE, LANE), f32).at[:EMBED_DIM, :HIDDEN].set(h * h)

    w2 = jnp.stack([lvl2_sum(params["hda"]), lvl2_sum(params["hdm"]),
                    lvl2_sq(params["hda"]), lvl2_sq(params["hdm"])])   # (4, 128, 128)

    # packed small constants; only row 0 of hidden_CA / hidden_CM is ever used
    consts = jnp.zeros((8, LANE), f32)
    consts = consts.at[0, :EMBED_DIM].set(params["bda"][0])
    consts = consts.at[1, :EMBED_DIM].set(params["bdm"][0])
    consts = consts.at[2, :HIDDEN].set(params["hca"][0])
    consts = consts.at[3, :HIDDEN].set(params["hcm"][0])
    consts = consts.at[4, :HIDDEN].set(params["fvda"][0])
    consts = consts.at[5, :HIDDEN].set(params["fvdm"][0])
    consts = consts.at[6, :HIDDEN].set(params["fvca"][0])
    consts = consts.at[7, :HIDDEN].set(params["fvcm"][0])
    consts = consts.at[6, HIDDEN].set(params["fm_w"][I_NUM, 0])       # fm weight (CA)
    consts = consts.at[7, HIDDEN].set(params["fm_w"][I_NUM + 1, 0])   # fm weight (CM)

    return dict(
        w_e=w_e, w2=w2, consts=consts,
        qkv=jnp.concatenate([params["q"], params["k"], params["v"]],
                            axis=1).astype(jnp.bfloat16),            # (64, 192)
        h1w=params["h1w"] * BN_SCALE,                                 # BatchNorm folded
        h1b=params["h1b"] * BN_SCALE,
        h2wt=params["h2w"].reshape(1, EMBED_DIM),                     # (1, 64)
        bias=params["fm_b"] + params["h2b"],                          # folded biases
    )


def _pick_tile_b(b):
    if b <= 16:
        return 16
    # >= 2 grid steps whenever possible so v7x's two TensorCores both get work;
    # cap at MAX_TILE_B to bound the per-step VMEM footprint on every generation.
    return min(MAX_TILE_B, _round_up(-(-b // 2), 16))


@jax.jit
def sanfm_forward(x, params):
    b = x.shape[0]
    pp = _prepare(params)

    tb = _pick_tile_b(b)
    b_pad = _round_up(b, tb)

    x_dense = x[:, :I_NUM].astype(jnp.bfloat16)                 # (B, 1536) bf16
    cat = x[:, I_NUM:].astype(jnp.float32)                      # (B, 2)    f32
    if b_pad != b:
        x_dense = jnp.pad(x_dense, ((0, b_pad - b), (0, 0)))
        cat = jnp.pad(cat, ((0, b_pad - b), (0, 0)))

    def const_spec(a):
        # whole-array block; constant index_map -> fetched once across the grid
        return pl.BlockSpec(a.shape, lambda i, nd=a.ndim: (0,) * nd)

    packed = pl.pallas_call(
        stage1_kernel,
        grid=(b_pad // tb,),
        out_shape=jax.ShapeDtypeStruct((b_pad, LANE), jnp.float32),
        in_specs=[pl.BlockSpec((tb, I_NUM), lambda i: (i, 0)),
                  pl.BlockSpec((tb, C_NUM), lambda i: (i, 0)),
                  const_spec(pp["w_e"]),
                  const_spec(pp["w2"]),
                  const_spec(pp["consts"])],
        out_specs=pl.BlockSpec((tb, LANE), lambda i: (i, 0)),
        compiler_params=pltpu.CompilerParams(
            dimension_semantics=("parallel",)),
    )(x_dense, cat, pp["w_e"], pp["w2"], pp["consts"])

    packed = packed[:b]

    vmem = pl.BlockSpec(memory_space=pltpu.MemorySpace.VMEM)
    out = pl.pallas_call(
        stage2_kernel,
        out_shape=jax.ShapeDtypeStruct((b, 1), jnp.float32),
        in_specs=[vmem] * 6,
        out_specs=vmem,
        compiler_params=pltpu.CompilerParams(
            vmem_limit_bytes=_STAGE2_VMEM_LIMIT),
    )(packed, pp["qkv"], pp["h1w"], pp["h1b"], pp["h2wt"], pp["bias"])

    return jnp.squeeze(out, axis=-1)                            # matches .squeeze() for B > 1


# ----------------------------------------------------------------------------------
# Parameters + pure-JAX f32 reference (mirrors the PyTorch forward, eval mode).
# ----------------------------------------------------------------------------------
def make_params(key):
    ks = jax.random.split(key, 20)
    n = jax.random.normal
    return {
        "fm_w": 0.02 * n(ks[0], (FEAT, 1), jnp.float32),
        "fm_b": jnp.zeros((1, 1), jnp.float32),
        "wda": 0.05 * n(ks[1], (768, EMBED_DIM), jnp.float32),
        "bda": 0.05 * n(ks[2], (1, EMBED_DIM), jnp.float32),
        "wdm": 0.05 * n(ks[3], (768, EMBED_DIM), jnp.float32),
        "bdm": 0.05 * n(ks[4], (1, EMBED_DIM), jnp.float32),
        "hda": 0.05 * n(ks[5], (EMBED_DIM, HIDDEN), jnp.float32),
        "hdm": 0.05 * n(ks[6], (EMBED_DIM, HIDDEN), jnp.float32),
        "hca": 0.05 * n(ks[7], (EMBED_DIM, HIDDEN), jnp.float32),
        "hcm": 0.05 * n(ks[8], (EMBED_DIM, HIDDEN), jnp.float32),
        "fvdm": 0.05 * n(ks[9], (1, HIDDEN), jnp.float32),
        "fvda": 0.05 * n(ks[10], (1, HIDDEN), jnp.float32),
        "fvcm": 0.05 * n(ks[11], (1, HIDDEN), jnp.float32),
        "fvca": 0.05 * n(ks[12], (1, HIDDEN), jnp.float32),
        "q": 0.05 * n(ks[13], (EMBED_DIM, EMBED_DIM), jnp.float32),
        "k": 0.05 * n(ks[14], (EMBED_DIM, EMBED_DIM), jnp.float32),
        "v": 0.05 * n(ks[15], (EMBED_DIM, EMBED_DIM), jnp.float32),
        "h1w": 0.05 * n(ks[16], (EMBED_DIM, EMBED_DIM), jnp.float32),
        "h1b": 0.05 * n(ks[17], (1, EMBED_DIM), jnp.float32),
        "h2w": 0.05 * n(ks[18], (EMBED_DIM, 1), jnp.float32),
        "h2b": 0.05 * n(ks[19], (1, 1), jnp.float32),
    }


def reference_forward(x, p):
    fm = x @ p["fm_w"] + p["fm_b"]
    inter_da = x[:, :768] @ p["wda"] + p["bda"]
    inter_dm = x[:, 768:1536] @ p["wdm"] + p["bdm"]
    inter_ca = x[:, 1536:1537]
    inter_cm = x[:, 1537:1538]

    hide_da = inter_da[:, :, None] * p["hda"][None]
    hide_dm = inter_dm[:, :, None] * p["hdm"][None]
    hide_ca = inter_ca[:, :, None] * p["hca"][None]
    hide_cm = inter_cm[:, :, None] * p["hcm"][None]

    def bi(t):
        s = t.sum(axis=1)
        return 0.5 * (s * s - (t * t).sum(axis=1))

    def dfi(fs_a, fs_b, a_hide, b_inter, fv_b):
        return jnp.einsum("bih,bj->bh", a_hide[:, :fs_a], b_inter[:, :fs_b]) * fv_b

    pooled = (
        bi(hide_da) + bi(hide_dm)
        + dfi(64, 64, hide_da, inter_dm, p["fvdm"])
        + dfi(64, 64, hide_dm, inter_da, p["fvda"])
        + dfi(64, 1, hide_da, inter_ca, p["fvca"])
        + dfi(1, 64, hide_ca, inter_da, p["fvda"])
        + dfi(64, 1, hide_da, inter_cm, p["fvcm"])
        + dfi(1, 64, hide_cm, inter_da, p["fvda"])
        + dfi(64, 1, hide_dm, inter_ca, p["fvca"])
        + dfi(1, 64, hide_ca, inter_dm, p["fvdm"])
        + dfi(64, 1, hide_dm, inter_cm, p["fvcm"])
        + dfi(1, 64, hide_cm, inter_dm, p["fvdm"])
        + dfi(1, 1, hide_ca, inter_cm, p["fvcm"])
        + dfi(1, 1, hide_cm, inter_ca, p["fvca"])
    )

    pq = pooled @ p["q"]
    pk = pooled @ p["k"]
    pv = pooled @ p["v"]
    attn = jax.nn.softmax(pq @ pk.T, axis=-1)
    value_weight = pv[:, None, :] * attn.T[:, :, None]
    vws = value_weight.sum(axis=0)

    h1 = vws @ p["h1w"] + p["h1b"]
    h1 = jnp.maximum(h1 / jnp.sqrt(1.0 + BN_EPS), 0.0)
    mlp_out = h1 @ p["h2w"] + p["h2b"]
    return jnp.squeeze(jax.nn.sigmoid(fm + mlp_out), axis=-1)


if __name__ == "__main__":
    key = jax.random.PRNGKey(0)
    k_x, k_p = jax.random.split(key)
    B = 8
    x = jax.random.normal(k_x, (B, FEAT), jnp.float32)
    params = make_params(k_p)

    out = jax.block_until_ready(sanfm_forward(x, params))
    ref = reference_forward(x, params)

    assert out.shape == (B,)
    assert bool(jnp.all(jnp.isfinite(out)))
    assert jnp.allclose(out, ref, atol=2e-2, rtol=2e-2), (out, ref)

    print("KERNEL_OK")
</pallas_src>

<mosaic_0001>
module attributes {stable_mosaic.version = 11 : i64} {
  func.func @stage1_kernel(%arg0: i32, %arg1: memref<16x1536xbf16, #tpu.memory_space<vmem>>, %arg2: memref<16x2xf32, #tpu.memory_space<vmem>>, %arg3: memref<2x768x128xbf16, #tpu.memory_space<vmem>>, %arg4: memref<4x128x128xf32, #tpu.memory_space<vmem>>, %arg5: memref<8x128xf32, #tpu.memory_space<vmem>>, %arg6: memref<16x128xf32, #tpu.memory_space<vmem>>) attributes {dimension_semantics = [#tpu.dimension_semantics<parallel>], iteration_bounds = array<i64: 1>, scalar_prefetch = 0 : i64, scratch_operands = 0 : i64, tpu.core_type = #tpu.core_type<tc>, window_params = [{transform_indices = @transform_0, window_bounds = array<i64: 16, 1536>}, {transform_indices = @transform_1, window_bounds = array<i64: 16, 2>}, {pipeline_mode = #tpu.pipeline_mode<synchronous>, transform_indices = @transform_2, window_bounds = array<i64: 2, 768, 128>}, {pipeline_mode = #tpu.pipeline_mode<synchronous>, transform_indices = @transform_3, window_bounds = array<i64: 4, 128, 128>}, {pipeline_mode = #tpu.pipeline_mode<synchronous>, transform_indices = @transform_4, window_bounds = array<i64: 8, 128>}, {transform_indices = @transform_5, window_bounds = array<i64: 16, 128>}]} {
    %c0 = arith.constant 0 : index
    %c0_0 = arith.constant 0 : index
    %0 = vector.load %arg1[%c0, %c0_0] : memref<16x1536xbf16, #tpu.memory_space<vmem>>, vector<16x1536xbf16>
    %c0_1 = arith.constant 0 : index
    %c0_2 = arith.constant 0 : index
    %1 = vector.load %arg2[%c0_1, %c0_2] : memref<16x2xf32, #tpu.memory_space<vmem>>, vector<16x2xf32>
    %2 = vector.extract_strided_slice %1 {offsets = [0, 0], sizes = [16, 1], strides = [1, 1]} : vector<16x2xf32> to vector<16x1xf32>
    %3 = vector.extract_strided_slice %1 {offsets = [0, 1], sizes = [16, 1], strides = [1, 1]} : vector<16x2xf32> to vector<16x1xf32>
    %c0_3 = arith.constant 0 : index
    %c0_4 = arith.constant 0 : index
    %4 = vector.load %arg5[%c0_3, %c0_4] : memref<8x128xf32, #tpu.memory_space<vmem>>, vector<8x128xf32>
    %5 = vector.extract_strided_slice %4 {offsets = [0, 0], sizes = [1, 128], strides = [1, 1]} : vector<8x128xf32> to vector<1x128xf32>
    %6 = vector.extract_strided_slice %4 {offsets = [1, 0], sizes = [1, 128], strides = [1, 1]} : vector<8x128xf32> to vector<1x128xf32>
    %7 = vector.extract_strided_slice %4 {offsets = [2, 0], sizes = [1, 64], strides = [1, 1]} : vector<8x128xf32> to vector<1x64xf32>
    %8 = vector.extract_strided_slice %4 {offsets = [3, 0], sizes = [1, 64], strides = [1, 1]} : vector<8x128xf32> to vector<1x64xf32>
    %9 = vector.extract_strided_slice %4 {offsets = [4, 0], sizes = [1, 64], strides = [1, 1]} : vector<8x128xf32> to vector<1x64xf32>
    %10 = vector.extract_strided_slice %4 {offsets = [5, 0], sizes = [1, 64], strides = [1, 1]} : vector<8x128xf32> to vector<1x64xf32>
    %11 = vector.extract_strided_slice %4 {offsets = [6, 0], sizes = [1, 64], strides = [1, 1]} : vector<8x128xf32> to vector<1x64xf32>
    %12 = vector.extract_strided_slice %4 {offsets = [7, 0], sizes = [1, 64], strides = [1, 1]} : vector<8x128xf32> to vector<1x64xf32>
    %13 = vector.extract_strided_slice %4 {offsets = [6, 64], sizes = [1, 1], strides = [1, 1]} : vector<8x128xf32> to vector<1x1xf32>
    %14 = vector.extract_strided_slice %4 {offsets = [7, 64], sizes = [1, 1], strides = [1, 1]} : vector<8x128xf32> to vector<1x1xf32>
    %15 = vector.extract_strided_slice %0 {offsets = [0, 0], sizes = [16, 768], strides = [1, 1]} : vector<16x1536xbf16> to vector<16x768xbf16>
    %c0_5 = arith.constant 0 : index
    %c0_6 = arith.constant 0 : index
    %c0_7 = arith.constant 0 : index
    %16 = vector.load %arg3[%c0_5, %c0_6, %c0_7] : memref<2x768x128xbf16, #tpu.memory_space<vmem>>, vector<1x768x128xbf16>
    %17 = vector.shape_cast %16 : vector<1x768x128xbf16> to vector<768x128xbf16>
    %cst = arith.constant dense<0.000000e+00> : vector<16x128xf32>
    %18 = tpu.matmul %15, %17, %cst {dimension_numbers = #tpu.dot_dimension_numbers<[1], [0], [0], [1], [0, 0, 1, 1], [], []>} : vector<16x768xbf16>, vector<768x128xbf16>, vector<16x128xf32> -> vector<16x128xf32>
    %19 = vector.broadcast %5 : vector<1x128xf32> to vector<16x128xf32>
    %20 = arith.addf %18, %19 : vector<16x128xf32>
    %21 = vector.extract_strided_slice %0 {offsets = [0, 768], sizes = [16, 768], strides = [1, 1]} : vector<16x1536xbf16> to vector<16x768xbf16>
    %c1 = arith.constant 1 : index
    %c0_8 = arith.constant 0 : index
    %c0_9 = arith.constant 0 : index
    %22 = vector.load %arg3[%c1, %c0_8, %c0_9] : memref<2x768x128xbf16, #tpu.memory_space<vmem>>, vector<1x768x128xbf16>
    %23 = vector.shape_cast %22 : vector<1x768x128xbf16> to vector<768x128xbf16>
    %cst_10 = arith.constant dense<0.000000e+00> : vector<16x128xf32>
    %24 = tpu.matmul %21, %23, %cst_10 {dimension_numbers = #tpu.dot_dimension_numbers<[1], [0], [0], [1], [0, 0, 1, 1], [], []>} : vector<16x768xbf16>, vector<768x128xbf16>, vector<16x128xf32> -> vector<16x128xf32>
    %25 = vector.broadcast %6 : vector<1x128xf32> to vector<16x128xf32>
    %26 = arith.addf %24, %25 : vector<16x128xf32>
    %c0_11 = arith.constant 0 : index
    %c0_12 = arith.constant 0 : index
    %c0_13 = arith.constant 0 : index
    %27 = vector.load %arg4[%c0_11, %c0_12, %c0_13] : memref<4x128x128xf32, #tpu.memory_space<vmem>>, vector<1x128x128xf32>
    %28 = vector.shape_cast %27 : vector<1x128x128xf32> to vector<128x128xf32>
    %cst_14 = arith.constant dense<0.000000e+00> : vector<16x128xf32>
    %29 = tpu.matmul %20, %28, %cst_14 {dimension_numbers = #tpu.dot_dimension_numbers<[1], [0], [0], [1], [0, 0, 1, 1], [], []>} : vector<16x128xf32>, vector<128x128xf32>, vector<16x128xf32> -> vector<16x128xf32>
    %c1_15 = arith.constant 1 : index
    %c0_16 = arith.constant 0 : index
    %c0_17 = arith.constant 0 : index
    %30 = vector.load %arg4[%c1_15, %c0_16, %c0_17] : memref<4x128x128xf32, #tpu.memory_space<vmem>>, vector<1x128x128xf32>
    %31 = vector.shape_cast %30 : vector<1x128x128xf32> to vector<128x128xf32>
    %cst_18 = arith.constant dense<0.000000e+00> : vector<16x128xf32>
    %32 = tpu.matmul %26, %31, %cst_18 {dimension_numbers = #tpu.dot_dimension_numbers<[1], [0], [0], [1], [0, 0, 1, 1], [], []>} : vector<16x128xf32>, vector<128x128xf32>, vector<16x128xf32> -> vector<16x128xf32>
    %33 = arith.mulf %20, %20 : vector<16x128xf32>
    %c2 = arith.constant 2 : index
    %c0_19 = arith.constant 0 : index
    %c0_20 = arith.constant 0 : index
    %34 = vector.load %arg4[%c2, %c0_19, %c0_20] : memref<4x128x128xf32, #tpu.memory_space<vmem>>, vector<1x128x128xf32>
    %35 = vector.shape_cast %34 : vector<1x128x128xf32> to vector<128x128xf32>
    %cst_21 = arith.constant dense<0.000000e+00> : vector<16x128xf32>
    %36 = tpu.matmul %33, %35, %cst_21 {dimension_numbers = #tpu.dot_dimension_numbers<[1], [0], [0], [1], [0, 0, 1, 1], [], []>} : vector<16x128xf32>, vector<128x128xf32>, vector<16x128xf32> -> vector<16x128xf32>
    %37 = arith.mulf %26, %26 : vector<16x128xf32>
    %c3 = arith.constant 3 : index
    %c0_22 = arith.constant 0 : index
    %c0_23 = arith.constant 0 : index
    %38 = vector.load %arg4[%c3, %c0_22, %c0_23] : memref<4x128x128xf32, #tpu.memory_space<vmem>>, vector<1x128x128xf32>
    %39 = vector.shape_cast %38 : vector<1x128x128xf32> to vector<128x128xf32>
    %cst_24 = arith.constant dense<0.000000e+00> : vector<16x128xf32>
    %40 = tpu.matmul %37, %39, %cst_24 {dimension_numbers = #tpu.dot_dimension_numbers<[1], [0], [0], [1], [0, 0, 1, 1], [], []>} : vector<16x128xf32>, vector<128x128xf32>, vector<16x128xf32> -> vector<16x128xf32>
    %41 = arith.addf %36, %40 : vector<16x128xf32>
    %42 = vector.extract_strided_slice %29 {offsets = [0, 0], sizes = [16, 64], strides = [1, 1]} : vector<16x128xf32> to vector<16x64xf32>
    %43 = vector.extract_strided_slice %32 {offsets = [0, 0], sizes = [16, 64], strides = [1, 1]} : vector<16x128xf32> to vector<16x64xf32>
    %44 = vector.extract_strided_slice %29 {offsets = [0, 64], sizes = [16, 1], strides = [1, 1]} : vector<16x128xf32> to vector<16x1xf32>
    %45 = vector.extract_strided_slice %32 {offsets = [0, 64], sizes = [16, 1], strides = [1, 1]} : vector<16x128xf32> to vector<16x1xf32>
    %46 = vector.extract_strided_slice %41 {offsets = [0, 0], sizes = [16, 64], strides = [1, 1]} : vector<16x128xf32> to vector<16x64xf32>
    %47 = arith.mulf %42, %42 : vector<16x64xf32>
    %48 = arith.mulf %43, %43 : vector<16x64xf32>
    %49 = arith.addf %47, %48 : vector<16x64xf32>
    %50 = arith.subf %49, %46 : vector<16x64xf32>
    %cst_25 = arith.constant 5.000000e-01 : f32
    %51 = vector.broadcast %cst_25 : f32 to vector<16x64xf32>
    %52 = arith.mulf %51, %50 : vector<16x64xf32>
    %53 = vector.broadcast %2 : vector<16x1xf32> to vector<16x64xf32>
    %54 = vector.broadcast %7 : vector<1x64xf32> to vector<16x64xf32>
    %55 = arith.mulf %53, %54 : vector<16x64xf32>
    %56 = vector.broadcast %3 : vector<16x1xf32> to vector<16x64xf32>
    %57 = vector.broadcast %8 : vector<1x64xf32> to vector<16x64xf32>
    %58 = arith.mulf %56, %57 : vector<16x64xf32>
    %59 = vector.broadcast %9 : vector<1x64xf32> to vector<16x64xf32>
    %60 = vector.broadcast %44 : vector<16x1xf32> to vector<16x64xf32>
    %61 = arith.mulf %59, %60 : vector<16x64xf32>
    %62 = vector.broadcast %10 : vector<1x64xf32> to vector<16x64xf32>
    %63 = vector.broadcast %45 : vector<16x1xf32> to vector<16x64xf32>
    %64 = arith.mulf %62, %63 : vector<16x64xf32>
    %65 = vector.broadcast %11 : vector<1x64xf32> to vector<16x64xf32>
    %66 = vector.broadcast %2 : vector<16x1xf32> to vector<16x64xf32>
    %67 = arith.mulf %65, %66 : vector<16x64xf32>
    %68 = vector.broadcast %12 : vector<1x64xf32> to vector<16x64xf32>
    %69 = vector.broadcast %3 : vector<16x1xf32> to vector<16x64xf32>
    %70 = arith.mulf %68, %69 : vector<16x64xf32>
    %71 = arith.addf %61, %64 : vector<16x64xf32>
    %72 = arith.addf %71, %67 : vector<16x64xf32>
    %73 = arith.addf %72, %70 : vector<16x64xf32>
    %74 = arith.addf %42, %43 : vector<16x64xf32>
    %75 = arith.addf %74, %55 : vector<16x64xf32>
    %76 = arith.addf %75, %58 : vector<16x64xf32>
    %77 = arith.mulf %42, %61 : vector<16x64xf32>
    %78 = arith.mulf %43, %64 : vector<16x64xf32>
    %79 = arith.addf %77, %78 : vector<16x64xf32>
    %80 = arith.mulf %55, %67 : vector<16x64xf32>
    %81 = arith.addf %79, %80 : vector<16x64xf32>
    %82 = arith.mulf %58, %70 : vector<16x64xf32>
    %83 = arith.addf %81, %82 : vector<16x64xf32>
    %84 = arith.mulf %76, %73 : vector<16x64xf32>
    %85 = arith.addf %52, %84 : vector<16x64xf32>
    %86 = arith.subf %85, %83 : vector<16x64xf32>
    %87 = vector.extract_strided_slice %20 {offsets = [0, 64], sizes = [16, 1], strides = [1, 1]} : vector<16x128xf32> to vector<16x1xf32>
    %88 = vector.extract_strided_slice %26 {offsets = [0, 64], sizes = [16, 1], strides = [1, 1]} : vector<16x128xf32> to vector<16x1xf32>
    %89 = arith.addf %87, %88 : vector<16x1xf32>
    %90 = vector.broadcast %13 : vector<1x1xf32> to vector<16x1xf32>
    %91 = arith.mulf %2, %90 : vector<16x1xf32>
    %92 = arith.addf %89, %91 : vector<16x1xf32>
    %93 = vector.broadcast %14 : vector<1x1xf32> to vector<16x1xf32>
    %94 = arith.mulf %3, %93 : vector<16x1xf32>
    %95 = arith.addf %92, %94 : vector<16x1xf32>
    %96 = vector.shape_cast %95 : vector<16x1xf32> to vector<16x1xf32>
    %97 = vector.broadcast %96 : vector<16x1xf32> to vector<16x64xf32>
    %98 = tpu.concatenate %86, %97 in 1 : vector<16x64xf32>, vector<16x64xf32> -> vector<16x128xf32>
    %c0_26 = arith.constant 0 : index
    %c0_27 = arith.constant 0 : index
    %99 = vector.load %arg6[%c0_26, %c0_27] : memref<16x128xf32, #tpu.memory_space<vmem>>, vector<16x128xf32>
    tpu.vector_store %arg6[%c0_26, %c0_27], %98 {strides = array<i32>} : memref<16x128xf32, #tpu.memory_space<vmem>>, vector<16x128xf32>,
    return
  }
  func.func @transform_0(%arg0: i32) -> (i32, i32) {
    %c0_i32 = arith.constant 0 : i32
    %c0_i32_0 = arith.constant 0 : i32
    return %arg0, %c0_i32 : i32, i32
  }
  func.func @transform_1(%arg0: i32) -> (i32, i32) {
    %c0_i32 = arith.constant 0 : i32
    %c0_i32_0 = arith.constant 0 : i32
    return %arg0, %c0_i32 : i32, i32
  }
  func.func @transform_2(%arg0: i32) -> (i32, i32, i32) {
    %c0_i32 = arith.constant 0 : i32
    %c0_i32_0 = arith.constant 0 : i32
    %c0_i32_1 = arith.constant 0 : i32
    %c0_i32_2 = arith.constant 0 : i32
    return %c0_i32, %c0_i32_0, %c0_i32_1 : i32, i32, i32
  }
  func.func @transform_3(%arg0: i32) -> (i32, i32, i32) {
    %c0_i32 = arith.constant 0 : i32
    %c0_i32_0 = arith.constant 0 : i32
    %c0_i32_1 = arith.constant 0 : i32
    %c0_i32_2 = arith.constant 0 : i32
    return %c0_i32, %c0_i32_0, %c0_i32_1 : i32, i32, i32
  }
  func.func @transform_4(%arg0: i32) -> (i32, i32) {
    %c0_i32 = arith.constant 0 : i32
    %c0_i32_0 = arith.constant 0 : i32
    %c0_i32_1 = arith.constant 0 : i32
    return %c0_i32, %c0_i32_0 : i32, i32
  }
  func.func @transform_5(%arg0: i32) -> (i32, i32) {
    %c0_i32 = arith.constant 0 : i32
    %c0_i32_0 = arith.constant 0 : i32
    return %arg0, %c0_i32 : i32, i32
  }
}

module attributes {stable_mosaic.version = 11 : i64} {
  func.func @stage2_kernel(%arg0: memref<8x128xf32, #tpu.memory_space<vmem>>, %arg1: memref<64x192xbf16, #tpu.memory_space<vmem>>, %arg2: memref<64x64xf32, #tpu.memory_space<vmem>>, %arg3: memref<1x64xf32, #tpu.memory_space<vmem>>, %arg4: memref<1x64xf32, #tpu.memory_space<vmem>>, %arg5: memref<1x1xf32, #tpu.memory_space<vmem>>, %arg6: memref<8x1xf32, #tpu.memory_space<vmem>>) attributes {dimension_semantics = [], scalar_prefetch = 0 : i64, scratch_operands = 0 : i64, tpu.core_type = #tpu.core_type<tc>} {
    %c0 = arith.constant 0 : index
    %c0_0 = arith.constant 0 : index
    %0 = vector.load %arg0[%c0, %c0_0] : memref<8x128xf32, #tpu.memory_space<vmem>>, vector<8x128xf32>
    %1 = vector.extract_strided_slice %0 {offsets = [0, 0], sizes = [8, 64], strides = [1, 1]} : vector<8x128xf32> to vector<8x64xf32>
    %2 = vector.extract_strided_slice %0 {offsets = [0, 64], sizes = [8, 1], strides = [1, 1]} : vector<8x128xf32> to vector<8x1xf32>
    %3 = arith.truncf %1 : vector<8x64xf32> to vector<8x64xbf16>
    %c0_1 = arith.constant 0 : index
    %c0_2 = arith.constant 0 : index
    %4 = vector.load %arg1[%c0_1, %c0_2] : memref<64x192xbf16, #tpu.memory_space<vmem>>, vector<64x192xbf16>
    %cst = arith.constant dense<0.000000e+00> : vector<8x192xf32>
    %5 = tpu.matmul %3, %4, %cst {dimension_numbers = #tpu.dot_dimension_numbers<[1], [0], [0], [1], [0, 0, 1, 1], [], []>} : vector<8x64xbf16>, vector<64x192xbf16>, vector<8x192xf32> -> vector<8x192xf32>
    %6 = vector.extract_strided_slice %5 {offsets = [0, 0], sizes = [8, 64], strides = [1, 1]} : vector<8x192xf32> to vector<8x64xf32>
    %7 = arith.truncf %6 : vector<8x64xf32> to vector<8x64xbf16>
    %8 = vector.extract_strided_slice %5 {offsets = [0, 64], sizes = [8, 64], strides = [1, 1]} : vector<8x192xf32> to vector<8x64xf32>
    %9 = arith.truncf %8 : vector<8x64xf32> to vector<8x64xbf16>
    %10 = vector.extract_strided_slice %5 {offsets = [0, 128], sizes = [8, 64], strides = [1, 1]} : vector<8x192xf32> to vector<8x64xf32>
    %11 = arith.truncf %10 : vector<8x64xf32> to vector<8x64xbf16>
    %cst_3 = arith.constant dense<0.000000e+00> : vector<8x8xf32>
    %12 = tpu.matmul %7, %9, %cst_3 {dimension_numbers = #tpu.dot_dimension_numbers<[1], [1], [0], [0], [0, 0, 1, 0], [], []>} : vector<8x64xbf16>, vector<8x64xbf16>, vector<8x8xf32> -> vector<8x8xf32>
    %cst_4 = arith.constant dense<0xFF800000> : vector<8xf32>
    %13 = vector.multi_reduction <maximumf>, %12, %cst_4 [1] : vector<8x8xf32> to vector<8xf32>
    %14 = vector.shape_cast %13 : vector<8xf32> to vector<8x1xf32>
    %15 = vector.broadcast %14 : vector<8x1xf32> to vector<8x8xf32>
    %16 = arith.subf %12, %15 : vector<8x8xf32>
    %17 = math.exp %16 : vector<8x8xf32>
    %cst_5 = arith.constant dense<0.000000e+00> : vector<8xf32>
    %18 = vector.multi_reduction <add>, %17, %cst_5 [1] : vector<8x8xf32> to vector<8xf32>
    %19 = vector.shape_cast %18 : vector<8xf32> to vector<8x1xf32>
    %20 = vector.broadcast %19 : vector<8x1xf32> to vector<8x8xf32>
    %21 = arith.divf %17, %20 : vector<8x8xf32>
    %22 = arith.truncf %21 : vector<8x8xf32> to vector<8x8xbf16>
    %cst_6 = arith.constant dense<0.000000e+00> : vector<8x64xf32>
    %23 = tpu.matmul %22, %11, %cst_6 {dimension_numbers = #tpu.dot_dimension_numbers<[1], [0], [0], [1], [0, 0, 1, 1], [], []>} : vector<8x8xbf16>, vector<8x64xbf16>, vector<8x64xf32> -> vector<8x64xf32>
    %c0_7 = arith.constant 0 : index
    %c0_8 = arith.constant 0 : index
    %24 = vector.load %arg2[%c0_7, %c0_8] : memref<64x64xf32, #tpu.memory_space<vmem>>, vector<64x64xf32>
    %cst_9 = arith.constant dense<0.000000e+00> : vector<8x64xf32>
    %25 = tpu.matmul %23, %24, %cst_9 {dimension_numbers = #tpu.dot_dimension_numbers<[1], [0], [0], [1], [0, 0, 1, 1], [], []>} : vector<8x64xf32>, vector<64x64xf32>, vector<8x64xf32> -> vector<8x64xf32>
    %c0_10 = arith.constant 0 : index
    %c0_11 = arith.constant 0 : index
    %26 = vector.load %arg3[%c0_10, %c0_11] : memref<1x64xf32, #tpu.memory_space<vmem>>, vector<1x64xf32>
    %27 = vector.broadcast %26 : vector<1x64xf32> to vector<8x64xf32>
    %28 = arith.addf %25, %27 : vector<8x64xf32>
    %cst_12 = arith.constant 0.000000e+00 : f32
    %29 = vector.broadcast %cst_12 : f32 to vector<8x64xf32>
    %30 = arith.maximumf %28, %29 : vector<8x64xf32>
    %c0_13 = arith.constant 0 : index
    %c0_14 = arith.constant 0 : index
    %31 = vector.load %arg4[%c0_13, %c0_14] : memref<1x64xf32, #tpu.memory_space<vmem>>, vector<1x64xf32>
    %32 = vector.broadcast %31 : vector<1x64xf32> to vector<8x64xf32>
    %33 = arith.mulf %30, %32 : vector<8x64xf32>
    %cst_15 = arith.constant dense<0.000000e+00> : vector<8xf32>
    %34 = vector.multi_reduction <add>, %33, %cst_15 [1] : vector<8x64xf32> to vector<8xf32>
    %35 = vector.shape_cast %34 : vector<8xf32> to vector<8x1xf32>
    %36 = arith.addf %2, %35 : vector<8x1xf32>
    %c0_16 = arith.constant 0 : index
    %c0_17 = arith.constant 0 : index
    %37 = vector.load %arg5[%c0_16, %c0_17] : memref<1x1xf32, #tpu.memory_space<vmem>>, vector<1x1xf32>
    %38 = vector.broadcast %37 : vector<1x1xf32> to vector<8x1xf32>
    %39 = arith.addf %36, %38 : vector<8x1xf32>
    %cst_18 = arith.constant 0.000000e+00 : f32
    %40 = vector.broadcast %cst_18 : f32 to vector<8x1xf32>
    %41 = arith.subf %40, %39 : vector<8x1xf32>
    %42 = math.exp %41 : vector<8x1xf32>
    %cst_19 = arith.constant 1.000000e+00 : f32
    %43 = vector.broadcast %cst_19 : f32 to vector<8x1xf32>
    %44 = arith.addf %43, %42 : vector<8x1xf32>
    %cst_20 = arith.constant 1.000000e+00 : f32
    %45 = vector.broadcast %cst_20 : f32 to vector<8x1xf32>
    %46 = arith.divf %45, %44 : vector<8x1xf32>
    %c0_21 = arith.constant 0 : index
    %c0_22 = arith.constant 0 : index
    %47 = vector.load %arg6[%c0_21, %c0_22] : memref<8x1xf32, #tpu.memory_space<vmem>>, vector<8x1xf32>
    tpu.vector_store %arg6[%c0_21, %c0_22], %46 {strides = array<i32>} : memref<8x1xf32, #tpu.memory_space<vmem>>, vector<8x1xf32>,
    return
  }
}

</mosaic_0001>

<llo_original>
// kernel: mul.9
$region0: #{mul.9}
  #allocation0 [shape = 's32[1]{0}', space=sflag, size = 0x4, scoped, tag = 'scoped memory for mul.9']
  %s0 = inlined_call_operand.vmem [shape: f32[64,64], index: 0, kind: input, shape index: {}, may-alias: {0,1}]
  %s1 = inlined_call_operand.vmem [shape: f32[64,64], index: 1, kind: input, shape index: {}, may-alias: {0,1}]
  %s2 = inlined_call_operand.vmem [shape: f32[64,64], index: 2, kind: output, shape index: {}]
  %v3 = vld [vmem:[%s0] sm:$0xff]
  %v4 = vld [vmem:[%s1] sm:$0xff]
  %5 = xla_tuple %v3, %v4
  %6 = xla_tuple %5
  %v7 = vmul.f32 %v3, %v4
  %8 = xla_tuple %v7
  %9 = vst [vmem:[%s2] sm:$0xff] %v7
  %s10 = scalar_lea.vmem %s0, 8
  %v11 = vld [vmem:[%s10] sm:$0xff]
  %s12 = scalar_lea.vmem %s1, 8
  %v13 = vld [vmem:[%s12] sm:$0xff]
  %14 = xla_tuple %v11, %v13
  %15 = xla_tuple %14
  %v16 = vmul.f32 %v11, %v13
  %17 = xla_tuple %v16
  %s18 = scalar_lea.vmem %s2, 8
  %19 = vst [vmem:[%s18] sm:$0xff] %v16
  %s20 = scalar_lea.vmem %s0, 16
  %v21 = vld [vmem:[%s20] sm:$0xff]
  %s22 = scalar_lea.vmem %s1, 16
  %v23 = vld [vmem:[%s22] sm:$0xff]
  %24 = xla_tuple %v21, %v23
  %25 = xla_tuple %24
  %v26 = vmul.f32 %v21, %v23
  %27 = xla_tuple %v26
  %s28 = scalar_lea.vmem %s2, 16
  %29 = vst [vmem:[%s28] sm:$0xff] %v26
  %s30 = scalar_lea.vmem %s0, 24
  %v31 = vld [vmem:[%s30] sm:$0xff]
  %s32 = scalar_lea.vmem %s1, 24
  %v33 = vld [vmem:[%s32] sm:$0xff]
  %34 = xla_tuple %v31, %v33
  %35 = xla_tuple %34
  %v36 = vmul.f32 %v31, %v33
  %37 = xla_tuple %v36
  %s38 = scalar_lea.vmem %s2, 24
  %39 = vst [vmem:[%s38] sm:$0xff] %v36
  %s40 = scalar_lea.vmem %s0, 32
  %v41 = vld [vmem:[%s40] sm:$0xff]
  %s42 = scalar_lea.vmem %s1, 32
  %v43 = vld [vmem:[%s42] sm:$0xff]
  %44 = xla_tuple %v41, %v43
  %45 = xla_tuple %44
  %v46 = vmul.f32 %v41, %v43
  %47 = xla_tuple %v46
  %s48 = scalar_lea.vmem %s2, 32
  %49 = vst [vmem:[%s48] sm:$0xff] %v46
  %s50 = scalar_lea.vmem %s0, 40
  %v51 = vld [vmem:[%s50] sm:$0xff]
  %s52 = scalar_lea.vmem %s1, 40
  %v53 = vld [vmem:[%s52] sm:$0xff]
  %54 = xla_tuple %v51, %v53
  %55 = xla_tuple %54
  %v56 = vmul.f32 %v51, %v53
  %57 = xla_tuple %v56
  %s58 = scalar_lea.vmem %s2, 40
  %59 = vst [vmem:[%s58] sm:$0xff] %v56
  %s60 = scalar_lea.vmem %s0, 48
  %v61 = vld [vmem:[%s60] sm:$0xff]
  %s62 = scalar_lea.vmem %s1, 48
  %v63 = vld [vmem:[%s62] sm:$0xff]
  %64 = xla_tuple %v61, %v63
  %65 = xla_tuple %64
  %v66 = vmul.f32 %v61, %v63
  %67 = xla_tuple %v66
  %s68 = scalar_lea.vmem %s2, 48
  %69 = vst [vmem:[%s68] sm:$0xff] %v66
  %s70 = scalar_lea.vmem %s0, 56
  %v71 = vld [vmem:[%s70] sm:$0xff]
  %s72 = scalar_lea.vmem %s1, 56
  %v73 = vld [vmem:[%s72] sm:$0xff]
  %74 = xla_tuple %v71, %v73
  %75 = xla_tuple %74
  %v76 = vmul.f32 %v71, %v73
  %77 = xla_tuple %v76
  %s78 = scalar_lea.vmem %s2, 56
  %79 = vst [vmem:[%s78] sm:$0xff] %v76

// kernel: sanfm_forward.3
$region0: #{sanfm_forward.3}
  #allocation0 [shape = 'u32[]', space=smem, size = 0x4, offset = 0x4, fixed_abs, tag = 'smem constant byte address 0x4 - core index']
  #allocation1 [shape = 'u32[144,128]{1,0:T(1,128)}', space=vmem, size = 0x12000, scoped, tag = 'internal scratch']
  #allocation2 [shape = 'f32[1,1]{1,0:T(1,128)S(1)}', space=vmem, size = 0x200, scoped, tag = 'scoped memory for sanfm_forward.3']
  %s0 = inlined_call_operand.vmem [shape: f32[8,128], index: 0, kind: input, shape index: {}]
  %s1 = inlined_call_operand.vmem [shape: bf16[64,192], index: 1, kind: input, shape index: {}]
  %s2 = inlined_call_operand.vmem [shape: f32[64,64], index: 2, kind: input, shape index: {}]
  %s3 = inlined_call_operand.vmem [shape: f32[1,64], index: 3, kind: input, shape index: {}]
  %s4 = inlined_call_operand.vmem [shape: f32[1,64], index: 4, kind: input, shape index: {}]
  %s5 = inlined_call_operand.<no memory space> [shape: f32[1,1], index: 5, kind: input, shape index: {}]
  %s6 = inlined_call_operand.vmem [shape: f32[8,1], index: 6, kind: output, shape index: {}]
  %s7 = sld [smem:[#allocation0]]
  $region34: #{sanfm_forward.3} parent=0
    _
  %s9 = ssub.s32 1, %s7
  %s10 = scalar_select 0, %s9, %s7
  %v11 = vstv %s5
  %12 = vst [vmem:[#allocation2] sm:$0x1] %v11
  // Predicated region
  $region2: #{sanfm_forward.3} parent=0 // pred_check
    _
  $region3: #{sanfm_forward.3} parent=0 // pred_check_branch
    %14 = sbr.rel (0) target = $region5
  $region4: #{sanfm_forward.3} parent=0 // pred_region
    _
  $region5: #{sanfm_forward.3} parent=0 // pred_fallthru
    _
  // Predicated region
  $region6: #{sanfm_forward.3} parent=0 // pred_check
    _
  $region7: #{sanfm_forward.3} parent=0 // pred_check_branch
    %16 = sbr.rel (0) target = $region9
  $region8: #{sanfm_forward.3} parent=0 // pred_region
    _
  $region9: #{sanfm_forward.3} parent=0 // pred_fallthru
    _
  // Predicated region
  $region10: #{sanfm_forward.3} parent=0 // pred_check
    _
  $region11: #{sanfm_forward.3} parent=0 // pred_check_branch
    %18 = sbr.rel (0) target = $region13
  $region12: #{sanfm_forward.3} parent=0 // pred_region
    _
  $region13: #{sanfm_forward.3} parent=0 // pred_fallthru
    _
  // Predicated region
  $region14: #{sanfm_forward.3} parent=0 // pred_check
    _
  $region15: #{sanfm_forward.3} parent=0 // pred_check_branch
    %20 = sbr.rel (0) target = $region17
  $region16: #{sanfm_forward.3} parent=0 // pred_region
    _
  $region17: #{sanfm_forward.3} parent=0 // pred_fallthru
    _
  // Predicated region
  $region18: #{sanfm_forward.3} parent=0 // pred_check
    _
  $region19: #{sanfm_forward.3} parent=0 // pred_check_branch
    %22 = sbr.rel (0) target = $region21
  $region20: #{sanfm_forward.3} parent=0 // pred_region
    _
  $region21: #{sanfm_forward.3} parent=0 // pred_fallthru
    _
  // Predicated region
  $region22: #{sanfm_forward.3} parent=0 // pred_check
    _
  $region23: #{sanfm_forward.3} parent=0 // pred_check_branch
    %24 = sbr.rel (0) target = $region25
  $region24: #{sanfm_forward.3} parent=0 // pred_region
    _
  $region25: #{sanfm_forward.3} parent=0 // pred_fallthru
    _
  %v26 = vld [vmem:[%s0] sm:$0xff]
  %v27 = vpack.c.bf16 %v26, %v26
  %v28 = vld [vmem:[%s1] sm:$0xff]
  %v29 = vld [vmem:[%s1 + $0x8] sm:$0xff]
  %v30 = vld [vmem:[%s1 + $0x10] sm:$0xff]
  %v31 = vld [vmem:[%s1 + $0x18] sm:$0xff]
  %v32 = vld [vmem:[%s1 + $0x20] sm:$0xff]
  %v33 = vld [vmem:[%s1 + $0x28] sm:$0xff]
  %v34 = vld [vmem:[%s1 + $0x30] sm:$0xff]
  %v35 = vld [vmem:[%s1 + $0x38] sm:$0xff]
  %v44 = vunpack.c.l.b16 %v28
  %v45 = vunpack.c.h.b16 %v28
  %v46 = vunpack.c.l.b16 %v29
  %v47 = vunpack.c.h.b16 %v29
  %v48 = vunpack.c.l.b16 %v30
  %v49 = vunpack.c.h.b16 %v30
  %v50 = vunpack.c.l.b16 %v31
  %v51 = vunpack.c.h.b16 %v31
  %v52 = vunpack.c.l.b16 %v32
  %v53 = vunpack.c.h.b16 %v32
  %v54 = vunpack.c.l.b16 %v33
  %v55 = vunpack.c.h.b16 %v33
  %v56 = vunpack.c.l.b16 %v34
  %v57 = vunpack.c.h.b16 %v34
  %v58 = vunpack.c.l.b16 %v35
  %v59 = vunpack.c.h.b16 %v35
  %v60 = vpack.c.b16 %v46, %v44
  %v61 = vpack.c.b16 %v47, %v45
  %v62 = vpack.c.b16 %v50, %v48
  %v63 = vpack.c.b16 %v51, %v49
  %v64 = vpack.c.b16 %v54, %v52
  %v65 = vpack.c.b16 %v55, %v53
  %v66 = vpack.c.b16 %v58, %v56
  %v67 = vpack.c.b16 %v59, %v57
  %vm76 = vcmask 523264
  %v78 = vsel %vm76, %v27, 0
  %80 = vmatprep.subr.bf16.mxu0 %v61
  %81 = vmatpush1.bf16.msra.mxu0 %v60
  %82 = vmatprep.subr.bf16.mxu0 %v63
  %83 = vmatpush1.bf16.msra.mxu0 %v62
  %84 = vmatprep.subr.bf16.mxu0 %v65
  %85 = vmatpush1.bf16.msra.mxu0 %v64
  %86 = vmatprep.subr.bf16.mxu0 %v67
  %87 = vmatpush1.bf16.msra.mxu0 %v66
  %88 = vmatprep.subr.bf16.mxu0 0
  %89 = vmatpush1.bf16.msra.mxu0 0
  %90 = vmatprep.subr.bf16.mxu0 0
  %91 = vmatpush1.bf16.msra.mxu0 0
  %92 = vmatprep.subr.bf16.mxu0 0
  %93 = vmatpush1.bf16.msra.mxu0 0
  %94 = vmatprep.subr.bf16.mxu0 0
  %95 = vmatpush1.bf16.msra.mxu0 0
  %96 = vmatprep.subr.bf16.mxu0 0
  %97 = vmatpush1.bf16.msra.mxu0 0
  %98 = vmatprep.subr.bf16.mxu0 0
  %99 = vmatpush1.bf16.msra.mxu0 0
  %100 = vmatprep.subr.bf16.mxu0 0
  %101 = vmatpush1.bf16.msra.mxu0 0
  %102 = vmatprep.subr.bf16.mxu0 0
  %103 = vmatpush1.bf16.msra.mxu0 0
  %104 = vmatprep.subr.bf16.mxu0 0
  %105 = vmatpush1.bf16.msra.mxu0 0
  %106 = vmatprep.subr.bf16.mxu0 0
  %107 = vmatpush1.bf16.msra.mxu0 0
  %108 = vmatprep.subr.bf16.mxu0 0
  %109 = vmatpush1.bf16.msra.mxu0 0
  %110 = vmatprep.subr.bf16.mxu0 0
  %111 = vmatpush1.bf16.msra.mxu0 0
  %112 = vmatprep.mubr.bf16.mxu0 0
  %113 = vmatmul.mubr.bf16.gmra.mrb[0].mxu0 %v78
  %v114 = vpop.f32.mrb[0].mxu0
  %v115 = vadd.f32 0.0, %v114
  %v116 = vpop.f32.mrb[0].mxu0
  %v117 = vadd.f32 0.0, %v116
  %v118 = vpop.f32.mrb[0].mxu0
  %v119 = vpop.f32.mrb[0].mxu0
  %120 = vdwg.mxu0
  %v121 = vpack.c.bf16 %v115, %v115
  %v122 = vpack.c.bf16 %v117, %v117
  %124 = vrot.lane.b32.xlu0 %v121, 64
  %v125 = vpop.permute.xlu0 %124
  %v127 = vsel %vm76, %v121, 0
  %v130 = vsel %vm76, %v125, 0
  %132 = vmatprep.subr.bf16.mxu0 0
  %133 = vmatpush1.bf16.xpose.msra.mxu0 %v130
  %134 = vmatprep.subr.bf16.mxu0 0
  %135 = vmatpush1.bf16.xpose.msra.mxu0 0
  %136 = vmatprep.subr.bf16.mxu0 0
  %137 = vmatpush1.bf16.xpose.msra.mxu0 0
  %138 = vmatprep.subr.bf16.mxu0 0
  %139 = vmatpush1.bf16.xpose.msra.mxu0 0
  %140 = vmatprep.subr.bf16.mxu0 0
  %141 = vmatpush1.bf16.xpose.msra.mxu0 0
  %142 = vmatprep.subr.bf16.mxu0 0
  %143 = vmatpush1.bf16.xpose.msra.mxu0 0
  %144 = vmatprep.subr.bf16.mxu0 0
  %145 = vmatpush1.bf16.xpose.msra.mxu0 0
  %146 = vmatprep.subr.bf16.mxu0 0
  %147 = vmatpush1.bf16.xpose.msra.mxu0 0
  %148 = vmatprep.subr.bf16.mxu0 0
  %149 = vmatpush1.bf16.xpose.msra.mxu0 0
  %150 = vmatprep.subr.bf16.mxu0 0
  %151 = vmatpush1.bf16.xpose.msra.mxu0 0
  %152 = vmatprep.subr.bf16.mxu0 0
  %153 = vmatpush1.bf16.xpose.msra.mxu0 0
  %154 = vmatprep.subr.bf16.mxu0 0
  %155 = vmatpush1.bf16.xpose.msra.mxu0 0
  %156 = vmatprep.subr.bf16.mxu0 0
  %157 = vmatpush1.bf16.xpose.msra.mxu0 0
  %158 = vmatprep.subr.bf16.mxu0 0
  %159 = vmatpush1.bf16.xpose.msra.mxu0 0
  %160 = vmatprep.subr.bf16.mxu0 0
  %161 = vmatpush1.bf16.xpose.msra.mxu0 0
  %162 = vmatprep.subr.bf16.mxu0 0
  %163 = vmatpush1.bf16.xpose.msra.mxu0 0
  %164 = vmatprep.mubr.bf16.mxu0 0
  %165 = vmatmul.mubr.bf16.gmra.mrb[0].mxu0 %v127
  %v166 = vpop.f32.mrb[0].mxu0
  %v167 = vadd.f32 0.0, %v166
  %v168 = vpop.f32.mrb[0].mxu0
  %v169 = vpop.f32.mrb[0].mxu0
  %v170 = vpop.f32.mrb[0].mxu0
  %171 = vdwg.mxu0
  %vm172 = vcmask 64512
  %v173 = vsel %vm172, %v167, -inf
  %174 = vmax.xlane.f32.xlu0 %v173
  %v175 = vpop.xlane.xlu0 %174
  %v176 = vsub.f32 %v167, %v175
  %v177 = vmul.f32 %v176, 1.442695
  %v178 = vpow.pop %v177
  %v179 = vsel %vm172, %v178, 0.0
  %180 = vadd.xlane.f32.xlu0 %v179
  %v181 = vpop.xlane.xlu0 %180
  %v182 = vrcp.pop %v181
  %v183 = vmul.f32 %v178, %v182
  %v184 = vpack.c.bf16 %v183, %v183
  %v186 = vsel %vm172, %v184, 0
  %vm188 = vcmask 1043456
  %v190 = vsel %vm188, %v122, 0
  %192 = vmatprep.subr.bf16.mxu0 0
  %193 = vmatpush1.bf16.msra.mxu0 %v190
  %194 = vmatprep.subr.bf16.mxu0 0
  %195 = vmatpush1.bf16.msra.mxu0 0
  %196 = vmatprep.subr.bf16.mxu0 0
  %197 = vmatpush1.bf16.msra.mxu0 0
  %198 = vmatprep.subr.bf16.mxu0 0
  %199 = vmatpush1.bf16.msra.mxu0 0
  %200 = vmatprep.subr.bf16.mxu0 0
  %201 = vmatpush1.bf16.msra.mxu0 0
  %202 = vmatprep.subr.bf16.mxu0 0
  %203 = vmatpush1.bf16.msra.mxu0 0
  %204 = vmatprep.subr.bf16.mxu0 0
  %205 = vmatpush1.bf16.msra.mxu0 0
  %206 = vmatprep.subr.bf16.mxu0 0
  %207 = vmatpush1.bf16.msra.mxu0 0
  %208 = vmatprep.subr.bf16.mxu0 0
  %209 = vmatpush1.bf16.msra.mxu0 0
  %210 = vmatprep.subr.bf16.mxu0 0
  %211 = vmatpush1.bf16.msra.mxu0 0
  %212 = vmatprep.subr.bf16.mxu0 0
  %213 = vmatpush1.bf16.msra.mxu0 0
  %214 = vmatprep.subr.bf16.mxu0 0
  %215 = vmatpush1.bf16.msra.mxu0 0
  %216 = vmatprep.subr.bf16.mxu0 0
  %217 = vmatpush1.bf16.msra.mxu0 0
  %218 = vmatprep.subr.bf16.mxu0 0
  %219 = vmatpush1.bf16.msra.mxu0 0
  %220 = vmatprep.subr.bf16.mxu0 0
  %221 = vmatpush1.bf16.msra.mxu0 0
  %222 = vmatprep.subr.bf16.mxu0 0
  %223 = vmatpush1.bf16.msra.mxu0 0
  %224 = vmatprep.mubr.bf16.mxu0 0
  %225 = vmatmul.mubr.bf16.gmra.mrb[0].mxu0 %v186
  %v226 = vpop.f32.mrb[0].mxu0
  %v227 = vadd.f32 0.0, %v226
  %v228 = vpop.f32.mrb[0].mxu0
  %v229 = vpop.f32.mrb[0].mxu0
  %v230 = vpop.f32.mrb[0].mxu0
  %231 = vdwg.mxu0
  %v232 = vld [vmem:[%s2] sm:$0xff]
  %v233 = vld [vmem:[%s2 + $0x8] sm:$0xff]
  %v234 = vld [vmem:[%s2 + $0x10] sm:$0xff]
  %v235 = vld [vmem:[%s2 + $0x18] sm:$0xff]
  %v236 = vld [vmem:[%s2 + $0x20] sm:$0xff]
  %v237 = vld [vmem:[%s2 + $0x28] sm:$0xff]
  %v238 = vld [vmem:[%s2 + $0x30] sm:$0xff]
  %v239 = vld [vmem:[%s2 + $0x38] sm:$0xff]
  %v240 = vld [vmem:[%s3] sm:$0x1]
  %v242 = vlaneseq
  %v243 = vshrl.u32 %v242, 7
  %v244 = vsub.s32 0, %v243
  %v245 = vrot.slane %v240, %v244
  %v248 = vsel %vm76, %v227, 0
  %250 = vmatprep.subr.mxu0 0.0
  %251 = vmatpush1.msra.mxu0 %v232
  %252 = vmatprep.subr.mxu0 0.0
  %253 = vmatpush1.msra.mxu0 %v233
  %254 = vmatprep.subr.mxu0 0.0
  %255 = vmatpush1.msra.mxu0 %v234
  %256 = vmatprep.subr.mxu0 0.0
  %257 = vmatpush1.msra.mxu0 %v235
  %258 = vmatprep.subr.mxu0 0.0
  %259 = vmatpush1.msra.mxu0 %v236
  %260 = vmatprep.subr.mxu0 0.0
  %261 = vmatpush1.msra.mxu0 %v237
  %262 = vmatprep.subr.mxu0 0.0
  %263 = vmatpush1.msra.mxu0 %v238
  %264 = vmatprep.subr.mxu0 0.0
  %265 = vmatpush1.msra.mxu0 %v239
  %266 = vmatprep.subr.mxu0 0.0
  %267 = vmatpush1.msra.mxu0 0.0
  %268 = vmatprep.subr.mxu0 0.0
  %269 = vmatpush1.msra.mxu0 0.0
  %270 = vmatprep.subr.mxu0 0.0
  %271 = vmatpush1.msra.mxu0 0.0
  %272 = vmatprep.subr.mxu0 0.0
  %273 = vmatpush1.msra.mxu0 0.0
  %274 = vmatprep.subr.mxu0 0.0
  %275 = vmatpush1.msra.mxu0 0.0
  %276 = vmatprep.subr.mxu0 0.0
  %277 = vmatpush1.msra.mxu0 0.0
  %278 = vmatprep.subr.mxu0 0.0
  %279 = vmatpush1.msra.mxu0 0.0
  %280 = vmatprep.subr.mxu0 0.0
  %281 = vmatpush1.msra.mxu0 0.0
  %282 = vmatprep.subr.mxu0 0.0
  %283 = vmatpush1.msra.mxu0 0.0
  %284 = vmatprep.subr.mxu0 0.0
  %285 = vmatpush1.msra.mxu0 0.0
  %286 = vmatprep.subr.mxu0 0.0
  %287 = vmatpush1.msra.mxu0 0.0
  %288 = vmatprep.subr.mxu0 0.0
  %289 = vmatpush1.msra.mxu0 0.0
  %290 = vmatprep.subr.mxu0 0.0
  %291 = vmatpush1.msra.mxu0 0.0
  %292 = vmatprep.subr.mxu0 0.0
  %293 = vmatpush1.msra.mxu0 0.0
  %294 = vmatprep.subr.mxu0 0.0
  %295 = vmatpush1.msra.mxu0 0.0
  %296 = vmatprep.subr.mxu0 0.0
  %297 = vmatpush1.msra.mxu0 0.0
  %298 = vmatprep.subr.mxu0 0.0
  %299 = vmatpush1.msra.mxu0 0.0
  %300 = vmatprep.subr.mxu0 0.0
  %301 = vmatpush1.msra.mxu0 0.0
  %302 = vmatprep.subr.mxu0 0.0
  %303 = vmatpush1.msra.mxu0 0.0
  %304 = vmatprep.subr.mxu0 0.0
  %305 = vmatpush1.msra.mxu0 0.0
  %306 = vmatprep.subr.mxu0 0.0
  %307 = vmatpush1.msra.mxu0 0.0
  %308 = vmatprep.subr.mxu0 0.0
  %309 = vmatpush1.msra.mxu0 0.0
  %310 = vmatprep.subr.mxu0 0.0
  %311 = vmatpush1.msra.mxu0 0.0
  %312 = vmatprep.subr.mxu0 0.0
  %313 = vmatpush1.msra.mxu0 0.0
  %314 = vmatprep.mubr.f32.mxu0 0.0
  %315 = vmatmul.mubr.f32.gmra.mrb[0].mxu0 %v248
  %v316 = vpop.f32.mrb[0].mxu0
  %v317 = vadd.f32 %v245, %v316
  %v318 = vpop.f32.mrb[0].mxu0
  %319 = vdwg.mxu0
  %v320 = vmax.f32 %v317, 0.0
  %v321 = vld [vmem:[%s4] sm:$0x1]
  %v323 = vlaneseq
  %v324 = vshrl.u32 %v323, 7
  %v325 = vsub.s32 0, %v324
  %v326 = vrot.slane %v321, %v325
  %v328 = vmul.f32 %v320, %v326
  %v329 = vsel %vm76, %v328, 0.0
  %330 = vadd.xlane.f32.xlu0 %v329
  %v331 = vpop.xlane.xlu0 %330
  %v332 = vadd.f32 %v26, %v331
  %v333 = vld [vmem:[#allocation2] sm:$0x1]
  %v335 = vlaneseq
  %v336 = vshrl.u32 %v335, 7
  %v337 = vsub.s32 0, %v336
  %v338 = vrot.slane %v333, %v337
  %339 = vrot.lane.b32.xlu0 %v338, 64
  %v340 = vpop.permute.xlu0 %339
  %v342 = vadd.f32 %v332, %v340
  %v343 = vsub.f32 0.0, %v342
  %v344 = vmul.f32 %v343, 1.442695
  %v345 = vpow.pop %v344
  %v346 = vadd.f32 %v345, 1.0
  %v347 = vrcp.pop %v346
  %v348 = vmul.f32 1.0, %v347
  %350 = vrot.lane.b32.xlu0 %v348, 64
  %v351 = vpop.permute.xlu0 %350
  %vm353 = vcmask 7168
  %354 = vst.msk [vmem:[%s6] sm:$0xff] %vm353, %v351
  // Predicated region
  $region26: #{sanfm_forward.3} parent=0 // pred_check
    _
  $region27: #{sanfm_forward.3} parent=0 // pred_check_branch
    %356 = sbr.rel (0) target = $region29
  $region28: #{sanfm_forward.3} parent=0 // pred_region
    _
  $region29: #{sanfm_forward.3} parent=0 // pred_fallthru
    _
  // Predicated region
  $region30: #{sanfm_forward.3} parent=0 // pred_check
    _
  $region31: #{sanfm_forward.3} parent=0 // pred_check_branch
    %358 = sbr.rel (0) target = $region33
  $region32: #{sanfm_forward.3} parent=0 // pred_region
    _
  $region33: #{sanfm_forward.3} parent=0 // pred_fallthru
    _

// kernel: sanfm_forward.2
$region0: #{sanfm_forward.2}
  #allocation0 [shape = 'u32[]', space=smem, size = 0x4, offset = 0x4, fixed_abs, tag = 'smem constant byte address 0x4 - core index']
  #allocation1 [shape = 'u32[144,128]{1,0:T(1,128)}', space=vmem, size = 0x12000, scoped, tag = 'internal scratch']
  %s0 = inlined_call_operand.vmem [shape: bf16[16,1536], index: 0, kind: input, shape index: {}]
  %s1 = inlined_call_operand.vmem [shape: f32[16,2], index: 1, kind: input, shape index: {}]
  %s2 = inlined_call_operand.vmem [shape: bf16[2,768,128], index: 2, kind: input, shape index: {}]
  %s3 = inlined_call_operand.vmem [shape: f32[4,128,128], index: 3, kind: input, shape index: {}]
  %s4 = inlined_call_operand.vmem [shape: f32[8,128], index: 4, kind: input, shape index: {}]
  %s5 = inlined_call_operand.vmem [shape: f32[16,128], index: 5, kind: output, shape index: {}]
  %s6 = sld [smem:[#allocation0]]
  $region30: #{sanfm_forward.2} parent=0
    _
  %s8 = ssub.s32 1, %s6
  %s9 = scalar_select 0, %s8, %s6
  // Predicated region
  $region2: #{sanfm_forward.2} parent=0 // pred_check
    _
  $region3: #{sanfm_forward.2} parent=0 // pred_check_branch
    %11 = sbr.rel (0) target = $region5
  $region4: #{sanfm_forward.2} parent=0 // pred_region
    _
  $region5: #{sanfm_forward.2} parent=0 // pred_fallthru
    _
  // Predicated region
  $region6: #{sanfm_forward.2} parent=0 // pred_check
    _
  $region7: #{sanfm_forward.2} parent=0 // pred_check_branch
    %13 = sbr.rel (0) target = $region9
  $region8: #{sanfm_forward.2} parent=0 // pred_region
    _
  $region9: #{sanfm_forward.2} parent=0 // pred_fallthru
    _
  // Predicated region
  $region10: #{sanfm_forward.2} parent=0 // pred_check
    _
  $region11: #{sanfm_forward.2} parent=0 // pred_check_branch
    %15 = sbr.rel (0) target = $region13
  $region12: #{sanfm_forward.2} parent=0 // pred_region
    _
  $region13: #{sanfm_forward.2} parent=0 // pred_fallthru
    _
  // Predicated region
  $region14: #{sanfm_forward.2} parent=0 // pred_check
    _
  $region15: #{sanfm_forward.2} parent=0 // pred_check_branch
    %17 = sbr.rel (0) target = $region17
  $region16: #{sanfm_forward.2} parent=0 // pred_region
    _
  $region17: #{sanfm_forward.2} parent=0 // pred_fallthru
    _
  // Predicated region
  $region18: #{sanfm_forward.2} parent=0 // pred_check
    _
  $region19: #{sanfm_forward.2} parent=0 // pred_check_branch
    %19 = sbr.rel (0) target = $region21
  $region20: #{sanfm_forward.2} parent=0 // pred_region
    _
  $region21: #{sanfm_forward.2} parent=0 // pred_fallthru
    _
  %v21 = vld [vmem:[%s0] sm:$0xff]
  %v22 = vld [vmem:[%s0 + $0x8] sm:$0xff]
  %v23 = vld [vmem:[%s0 + $0x10] sm:$0xff]
  %v24 = vld [vmem:[%s0 + $0x18] sm:$0xff]
  %v25 = vld [vmem:[%s0 + $0x20] sm:$0xff]
  %v26 = vld [vmem:[%s0 + $0x28] sm:$0xff]
  %v27 = vld [vmem:[%s0 + $0x30] sm:$0xff]
  %v28 = vld [vmem:[%s0 + $0x38] sm:$0xff]
  %v29 = vld [vmem:[%s0 + $0x40] sm:$0xff]
  %v30 = vld [vmem:[%s0 + $0x48] sm:$0xff]
  %v31 = vld [vmem:[%s0 + $0x50] sm:$0xff]
  %v32 = vld [vmem:[%s0 + $0x58] sm:$0xff]
  %v33 = vld [vmem:[%s1] sm:$0xff]
  %v34 = vld [vmem:[%s1 + $0x8] sm:$0xff]
  %v35 = vld [vmem:[%s4] sm:$0xff]
  %v36 = vld [vmem:[%s2] sm:$0xf]
  %v37 = vld [vmem:[%s2 + $0x4] sm:$0xf]
  %v38 = vld [vmem:[%s2 + $0x8] sm:$0xf]
  %v39 = vld [vmem:[%s2 + $0xc] sm:$0xf]
  %v40 = vld [vmem:[%s2 + $0x10] sm:$0xf]
  %v41 = vld [vmem:[%s2 + $0x14] sm:$0xf]
  %v42 = vld [vmem:[%s2 + $0x18] sm:$0xf]
  %v43 = vld [vmem:[%s2 + $0x1c] sm:$0xf]
  %v44 = vld [vmem:[%s2 + $0x20] sm:$0xf]
  %v45 = vld [vmem:[%s2 + $0x24] sm:$0xf]
  %v46 = vld [vmem:[%s2 + $0x28] sm:$0xf]
  %v47 = vld [vmem:[%s2 + $0x2c] sm:$0xf]
  %v48 = vld [vmem:[%s2 + $0x30] sm:$0xf]
  %v49 = vld [vmem:[%s2 + $0x34] sm:$0xf]
  %v50 = vld [vmem:[%s2 + $0x38] sm:$0xf]
  %v51 = vld [vmem:[%s2 + $0x3c] sm:$0xf]
  %v52 = vld [vmem:[%s2 + $0x40] sm:$0xf]
  %v53 = vld [vmem:[%s2 + $0x44] sm:$0xf]
  %v54 = vld [vmem:[%s2 + $0x48] sm:$0xf]
  %v55 = vld [vmem:[%s2 + $0x4c] sm:$0xf]
  %v56 = vld [vmem:[%s2 + $0x50] sm:$0xf]
  %v57 = vld [vmem:[%s2 + $0x54] sm:$0xf]
  %v58 = vld [vmem:[%s2 + $0x58] sm:$0xf]
  %v59 = vld [vmem:[%s2 + $0x5c] sm:$0xf]
  %v60 = vld [vmem:[%s2 + $0x60] sm:$0xf]
  %v61 = vld [vmem:[%s2 + $0x64] sm:$0xf]
  %v62 = vld [vmem:[%s2 + $0x68] sm:$0xf]
  %v63 = vld [vmem:[%s2 + $0x6c] sm:$0xf]
  %v64 = vld [vmem:[%s2 + $0x70] sm:$0xf]
  %v65 = vld [vmem:[%s2 + $0x74] sm:$0xf]
  %v66 = vld [vmem:[%s2 + $0x78] sm:$0xf]
  %v67 = vld [vmem:[%s2 + $0x7c] sm:$0xf]
  %v68 = vld [vmem:[%s2 + $0x80] sm:$0xf]
  %v69 = vld [vmem:[%s2 + $0x84] sm:$0xf]
  %v70 = vld [vmem:[%s2 + $0x88] sm:$0xf]
  %v71 = vld [vmem:[%s2 + $0x8c] sm:$0xf]
  %v72 = vld [vmem:[%s2 + $0x90] sm:$0xf]
  %v73 = vld [vmem:[%s2 + $0x94] sm:$0xf]
  %v74 = vld [vmem:[%s2 + $0x98] sm:$0xf]
  %v75 = vld [vmem:[%s2 + $0x9c] sm:$0xf]
  %v76 = vld [vmem:[%s2 + $0xa0] sm:$0xf]
  %v77 = vld [vmem:[%s2 + $0xa4] sm:$0xf]
  %v78 = vld [vmem:[%s2 + $0xa8] sm:$0xf]
  %v79 = vld [vmem:[%s2 + $0xac] sm:$0xf]
  %v80 = vld [vmem:[%s2 + $0xb0] sm:$0xf]
  %v81 = vld [vmem:[%s2 + $0xb4] sm:$0xf]
  %v82 = vld [vmem:[%s2 + $0xb8] sm:$0xf]
  %v83 = vld [vmem:[%s2 + $0xbc] sm:$0xf]
  %v84 = vld [vmem:[%s2 + $0xc0] sm:$0xf]
  %v85 = vld [vmem:[%s2 + $0xc4] sm:$0xf]
  %v86 = vld [vmem:[%s2 + $0xc8] sm:$0xf]
  %v87 = vld [vmem:[%s2 + $0xcc] sm:$0xf]
  %v88 = vld [vmem:[%s2 + $0xd0] sm:$0xf]
  %v89 = vld [vmem:[%s2 + $0xd4] sm:$0xf]
  %v90 = vld [vmem:[%s2 + $0xd8] sm:$0xf]
  %v91 = vld [vmem:[%s2 + $0xdc] sm:$0xf]
  %v92 = vld [vmem:[%s2 + $0xe0] sm:$0xf]
  %v93 = vld [vmem:[%s2 + $0xe4] sm:$0xf]
  %v94 = vld [vmem:[%s2 + $0xe8] sm:$0xf]
  %v95 = vld [vmem:[%s2 + $0xec] sm:$0xf]
  %v96 = vld [vmem:[%s2 + $0xf0] sm:$0xf]
  %v97 = vld [vmem:[%s2 + $0xf4] sm:$0xf]
  %v98 = vld [vmem:[%s2 + $0xf8] sm:$0xf]
  %v99 = vld [vmem:[%s2 + $0xfc] sm:$0xf]
  %v100 = vld [vmem:[%s2 + $0x100] sm:$0xf]
  %v101 = vld [vmem:[%s2 + $0x104] sm:$0xf]
  %v102 = vld [vmem:[%s2 + $0x108] sm:$0xf]
  %v103 = vld [vmem:[%s2 + $0x10c] sm:$0xf]
  %v104 = vld [vmem:[%s2 + $0x110] sm:$0xf]
  %v105 = vld [vmem:[%s2 + $0x114] sm:$0xf]
  %v106 = vld [vmem:[%s2 + $0x118] sm:$0xf]
  %v107 = vld [vmem:[%s2 + $0x11c] sm:$0xf]
  %v108 = vld [vmem:[%s2 + $0x120] sm:$0xf]
  %v109 = vld [vmem:[%s2 + $0x124] sm:$0xf]
  %v110 = vld [vmem:[%s2 + $0x128] sm:$0xf]
  %v111 = vld [vmem:[%s2 + $0x12c] sm:$0xf]
  %v112 = vld [vmem:[%s2 + $0x130] sm:$0xf]
  %v113 = vld [vmem:[%s2 + $0x134] sm:$0xf]
  %v114 = vld [vmem:[%s2 + $0x138] sm:$0xf]
  %v115 = vld [vmem:[%s2 + $0x13c] sm:$0xf]
  %v116 = vld [vmem:[%s2 + $0x140] sm:$0xf]
  %v117 = vld [vmem:[%s2 + $0x144] sm:$0xf]
  %v118 = vld [vmem:[%s2 + $0x148] sm:$0xf]
  %v119 = vld [vmem:[%s2 + $0x14c] sm:$0xf]
  %v120 = vld [vmem:[%s2 + $0x150] sm:$0xf]
  %v121 = vld [vmem:[%s2 + $0x154] sm:$0xf]
  %v122 = vld [vmem:[%s2 + $0x158] sm:$0xf]
  %v123 = vld [vmem:[%s2 + $0x15c] sm:$0xf]
  %v124 = vld [vmem:[%s2 + $0x160] sm:$0xf]
  %v125 = vld [vmem:[%s2 + $0x164] sm:$0xf]
  %v126 = vld [vmem:[%s2 + $0x168] sm:$0xf]
  %v127 = vld [vmem:[%s2 + $0x16c] sm:$0xf]
  %v128 = vld [vmem:[%s2 + $0x170] sm:$0xf]
  %v129 = vld [vmem:[%s2 + $0x174] sm:$0xf]
  %v130 = vld [vmem:[%s2 + $0x178] sm:$0xf]
  %v131 = vld [vmem:[%s2 + $0x17c] sm:$0xf]
  %v132 = vlaneseq
  %v133 = vshrl.u32 %v132, 7
  %v134 = vsub.s32 0, %v133
  %v135 = vrot.slane %v35, %v134
  %v142 = vunpack.c.l.b16 %v21
  %v143 = vunpack.c.h.b16 %v21
  %v144 = vunpack.c.l.b16 %v22
  %v145 = vunpack.c.h.b16 %v22
  %v146 = vunpack.c.l.b16 %v23
  %v147 = vunpack.c.h.b16 %v23
  %v148 = vunpack.c.l.b16 %v27
  %v149 = vunpack.c.h.b16 %v27
  %v150 = vunpack.c.l.b16 %v28
  %v151 = vunpack.c.h.b16 %v28
  %v152 = vunpack.c.l.b16 %v29
  %v153 = vunpack.c.h.b16 %v29
  %v154 = vpack.c.b16 %v148, %v142
  %v155 = vpack.c.b16 %v149, %v143
  %v156 = vpack.c.b16 %v150, %v144
  %v157 = vpack.c.b16 %v151, %v145
  %v158 = vpack.c.b16 %v152, %v146
  %v159 = vpack.c.b16 %v153, %v147
  %v262 = vunpack.c.l.b16 %v36
  %v263 = vunpack.c.l.b16 %v37
  %v264 = vunpack.c.l.b16 %v38
  %v265 = vunpack.c.l.b16 %v39
  %v266 = vunpack.c.l.b16 %v40
  %v267 = vunpack.c.l.b16 %v41
  %v268 = vunpack.c.l.b16 %v42
  %v269 = vunpack.c.l.b16 %v43
  %v270 = vunpack.c.l.b16 %v44
  %v271 = vunpack.c.l.b16 %v45
  %v272 = vunpack.c.l.b16 %v46
  %v273 = vunpack.c.l.b16 %v47
  %v274 = vunpack.c.l.b16 %v48
  %v275 = vunpack.c.l.b16 %v49
  %v276 = vunpack.c.l.b16 %v50
  %v277 = vunpack.c.l.b16 %v51
  %v278 = vunpack.c.l.b16 %v52
  %v279 = vunpack.c.l.b16 %v53
  %v280 = vunpack.c.l.b16 %v54
  %v281 = vunpack.c.l.b16 %v55
  %v282 = vunpack.c.l.b16 %v56
  %v283 = vunpack.c.l.b16 %v57
  %v284 = vunpack.c.l.b16 %v58
  %v285 = vunpack.c.l.b16 %v59
  %v286 = vunpack.c.l.b16 %v60
  %v287 = vunpack.c.l.b16 %v61
  %v288 = vunpack.c.l.b16 %v62
  %v289 = vunpack.c.l.b16 %v63
  %v290 = vunpack.c.l.b16 %v64
  %v291 = vunpack.c.l.b16 %v65
  %v292 = vunpack.c.l.b16 %v66
  %v293 = vunpack.c.l.b16 %v67
  %v294 = vunpack.c.l.b16 %v68
  %v295 = vunpack.c.l.b16 %v69
  %v296 = vunpack.c.l.b16 %v70
  %v297 = vunpack.c.l.b16 %v71
  %v298 = vunpack.c.l.b16 %v72
  %v299 = vunpack.c.l.b16 %v73
  %v300 = vunpack.c.l.b16 %v74
  %v301 = vunpack.c.l.b16 %v75
  %v302 = vunpack.c.l.b16 %v76
  %v303 = vunpack.c.l.b16 %v77
  %v304 = vunpack.c.l.b16 %v78
  %v305 = vunpack.c.l.b16 %v79
  %v306 = vunpack.c.l.b16 %v80
  %v307 = vunpack.c.l.b16 %v81
  %v308 = vunpack.c.l.b16 %v82
  %v309 = vunpack.c.l.b16 %v83
  %v310 = vunpack.c.l.b16 %v84
  %v311 = vunpack.c.l.b16 %v85
  %v312 = vunpack.c.l.b16 %v86
  %v313 = vunpack.c.l.b16 %v87
  %v314 = vunpack.c.l.b16 %v88
  %v315 = vunpack.c.l.b16 %v89
  %v316 = vunpack.c.l.b16 %v90
  %v317 = vunpack.c.l.b16 %v91
  %v318 = vunpack.c.l.b16 %v92
  %v319 = vunpack.c.l.b16 %v93
  %v320 = vunpack.c.l.b16 %v94
  %v321 = vunpack.c.l.b16 %v95
  %v322 = vunpack.c.l.b16 %v96
  %v323 = vunpack.c.l.b16 %v97
  %v324 = vunpack.c.l.b16 %v98
  %v325 = vunpack.c.l.b16 %v99
  %v326 = vunpack.c.l.b16 %v100
  %v327 = vunpack.c.l.b16 %v101
  %v328 = vunpack.c.l.b16 %v102
  %v329 = vunpack.c.l.b16 %v103
  %v330 = vunpack.c.l.b16 %v104
  %v331 = vunpack.c.l.b16 %v105
  %v332 = vunpack.c.l.b16 %v106
  %v333 = vunpack.c.l.b16 %v107
  %v334 = vunpack.c.l.b16 %v108
  %v335 = vunpack.c.l.b16 %v109
  %v336 = vunpack.c.l.b16 %v110
  %v337 = vunpack.c.l.b16 %v111
  %v338 = vunpack.c.l.b16 %v112
  %v339 = vunpack.c.l.b16 %v113
  %v340 = vunpack.c.l.b16 %v114
  %v341 = vunpack.c.l.b16 %v115
  %v342 = vunpack.c.l.b16 %v116
  %v343 = vunpack.c.l.b16 %v117
  %v344 = vunpack.c.l.b16 %v118
  %v345 = vunpack.c.l.b16 %v119
  %v346 = vunpack.c.l.b16 %v120
  %v347 = vunpack.c.l.b16 %v121
  %v348 = vunpack.c.l.b16 %v122
  %v349 = vunpack.c.l.b16 %v123
  %v350 = vunpack.c.l.b16 %v124
  %v351 = vunpack.c.l.b16 %v125
  %v352 = vunpack.c.l.b16 %v126
  %v353 = vunpack.c.l.b16 %v127
  %v354 = vunpack.c.l.b16 %v128
  %v355 = vunpack.c.l.b16 %v129
  %v356 = vunpack.c.l.b16 %v130
  %v357 = vunpack.c.l.b16 %v131
  %v358 = vpack.c.b16 %v263, %v262
  %v359 = vpack.c.b16 %v265, %v264
  %v360 = vpack.c.b16 %v267, %v266
  %v361 = vpack.c.b16 %v269, %v268
  %v362 = vpack.c.b16 %v271, %v270
  %v363 = vpack.c.b16 %v273, %v272
  %v364 = vpack.c.b16 %v275, %v274
  %v365 = vpack.c.b16 %v277, %v276
  %v366 = vpack.c.b16 %v279, %v278
  %v367 = vpack.c.b16 %v281, %v280
  %v368 = vpack.c.b16 %v283, %v282
  %v369 = vpack.c.b16 %v285, %v284
  %v370 = vpack.c.b16 %v287, %v286
  %v371 = vpack.c.b16 %v289, %v288
  %v372 = vpack.c.b16 %v291, %v290
  %v373 = vpack.c.b16 %v293, %v292
  %v374 = vpack.c.b16 %v295, %v294
  %v375 = vpack.c.b16 %v297, %v296
  %v376 = vpack.c.b16 %v299, %v298
  %v377 = vpack.c.b16 %v301, %v300
  %v378 = vpack.c.b16 %v303, %v302
  %v379 = vpack.c.b16 %v305, %v304
  %v380 = vpack.c.b16 %v307, %v306
  %v381 = vpack.c.b16 %v309, %v308
  %v382 = vpack.c.b16 %v311, %v310
  %v383 = vpack.c.b16 %v313, %v312
  %v384 = vpack.c.b16 %v315, %v314
  %v385 = vpack.c.b16 %v317, %v316
  %v386 = vpack.c.b16 %v319, %v318
  %v387 = vpack.c.b16 %v321, %v320
  %v388 = vpack.c.b16 %v323, %v322
  %v389 = vpack.c.b16 %v325, %v324
  %v390 = vpack.c.b16 %v327, %v326
  %v391 = vpack.c.b16 %v329, %v328
  %v392 = vpack.c.b16 %v331, %v330
  %v393 = vpack.c.b16 %v333, %v332
  %v394 = vpack.c.b16 %v335, %v334
  %v395 = vpack.c.b16 %v337, %v336
  %v396 = vpack.c.b16 %v339, %v338
  %v397 = vpack.c.b16 %v341, %v340
  %v398 = vpack.c.b16 %v343, %v342
  %v399 = vpack.c.b16 %v345, %v344
  %v400 = vpack.c.b16 %v347, %v346
  %v401 = vpack.c.b16 %v349, %v348
  %v402 = vpack.c.b16 %v351, %v350
  %v403 = vpack.c.b16 %v353, %v352
  %v404 = vpack.c.b16 %v355, %v354
  %v405 = vpack.c.b16 %v357, %v356
  %454 = vmatprep.subr.bf16.mxu0 0
  %455 = vmatpush1.bf16.msra.mxu0 %v358
  %456 = vmatprep.subr.bf16.mxu0 0
  %457 = vmatpush1.bf16.msra.mxu0 %v359
  %458 = vmatprep.subr.bf16.mxu0 0
  %459 = vmatpush1.bf16.msra.mxu0 %v360
  %460 = vmatprep.subr.bf16.mxu0 0
  %461 = vmatpush1.bf16.msra.mxu0 %v361
  %462 = vmatprep.subr.bf16.mxu0 0
  %463 = vmatpush1.bf16.msra.mxu0 %v362
  %464 = vmatprep.subr.bf16.mxu0 0
  %465 = vmatpush1.bf16.msra.mxu0 %v363
  %466 = vmatprep.subr.bf16.mxu0 0
  %467 = vmatpush1.bf16.msra.mxu0 %v364
  %468 = vmatprep.subr.bf16.mxu0 0
  %469 = vmatpush1.bf16.msra.mxu0 %v365
  %470 = vmatprep.subr.bf16.mxu0 0
  %471 = vmatpush1.bf16.msra.mxu0 %v366
  %472 = vmatprep.subr.bf16.mxu0 0
  %473 = vmatpush1.bf16.msra.mxu0 %v367
  %474 = vmatprep.subr.bf16.mxu0 0
  %475 = vmatpush1.bf16.msra.mxu0 %v368
  %476 = vmatprep.subr.bf16.mxu0 0
  %477 = vmatpush1.bf16.msra.mxu0 %v369
  %478 = vmatprep.subr.bf16.mxu0 0
  %479 = vmatpush1.bf16.msra.mxu0 %v370
  %480 = vmatprep.subr.bf16.mxu0 0
  %481 = vmatpush1.bf16.msra.mxu0 %v371
  %482 = vmatprep.subr.bf16.mxu0 0
  %483 = vmatpush1.bf16.msra.mxu0 %v372
  %484 = vmatprep.subr.bf16.mxu0 0
  %485 = vmatpush1.bf16.msra.mxu0 %v373
  %486 = vmatprep.mubr.bf16.mxu0 %v155
  %487 = vmatmul.mubr.bf16.gmra.mrb[0].mxu0 %v154
  %v488 = vpop.f32.mrb[0].mxu0
  %v489 = vadd.f32 %v135, %v488
  %v490 = vpop.f32.mrb[0].mxu0
  %v491 = vpop.f32.mrb[0].mxu0
  %v492 = vadd.f32 %v135, %v491
  %v493 = vpop.f32.mrb[0].mxu0
  %494 = vdwg.mxu0
  %495 = vmatprep.subr.bf16.mxu0 0
  %496 = vmatpush1.bf16.msra.mxu0 %v374
  %497 = vmatprep.subr.bf16.mxu0 0
  %498 = vmatpush1.bf16.msra.mxu0 %v375
  %499 = vmatprep.subr.bf16.mxu0 0
  %500 = vmatpush1.bf16.msra.mxu0 %v376
  %501 = vmatprep.subr.bf16.mxu0 0
  %502 = vmatpush1.bf16.msra.mxu0 %v377
  %503 = vmatprep.subr.bf16.mxu0 0
  %504 = vmatpush1.bf16.msra.mxu0 %v378
  %505 = vmatprep.subr.bf16.mxu0 0
  %506 = vmatpush1.bf16.msra.mxu0 %v379
  %507 = vmatprep.subr.bf16.mxu0 0
  %508 = vmatpush1.bf16.msra.mxu0 %v380
  %509 = vmatprep.subr.bf16.mxu0 0
  %510 = vmatpush1.bf16.msra.mxu0 %v381
  %511 = vmatprep.subr.bf16.mxu0 0
  %512 = vmatpush1.bf16.msra.mxu0 %v382
  %513 = vmatprep.subr.bf16.mxu0 0
  %514 = vmatpush1.bf16.msra.mxu0 %v383
  %515 = vmatprep.subr.bf16.mxu0 0
  %516 = vmatpush1.bf16.msra.mxu0 %v384
  %517 = vmatprep.subr.bf16.mxu0 0
  %518 = vmatpush1.bf16.msra.mxu0 %v385
  %519 = vmatprep.subr.bf16.mxu0 0
  %520 = vmatpush1.bf16.msra.mxu0 %v386
  %521 = vmatprep.subr.bf16.mxu0 0
  %522 = vmatpush1.bf16.msra.mxu0 %v387
  %523 = vmatprep.subr.bf16.mxu0 0
  %524 = vmatpush1.bf16.msra.mxu0 %v388
  %525 = vmatprep.subr.bf16.mxu0 0
  %526 = vmatpush1.bf16.msra.mxu0 %v389
  %527 = vmatprep.mubr.bf16.mxu0 %v157
  %528 = vmatmul.mubr.bf16.gmra.mrb[0].mxu0 %v156
  %v529 = vpop.f32.mrb[0].mxu0
  %v530 = vadd.f32 %v489, %v529
  %v531 = vpop.f32.mrb[0].mxu0
  %v532 = vpop.f32.mrb[0].mxu0
  %v533 = vadd.f32 %v492, %v532
  %v534 = vpop.f32.mrb[0].mxu0
  %535 = vdwg.mxu0
  %536 = vmatprep.subr.bf16.mxu0 0
  %537 = vmatpush1.bf16.msra.mxu0 %v390
  %538 = vmatprep.subr.bf16.mxu0 0
  %539 = vmatpush1.bf16.msra.mxu0 %v391
  %540 = vmatprep.subr.bf16.mxu0 0
  %541 = vmatpush1.bf16.msra.mxu0 %v392
  %542 = vmatprep.subr.bf16.mxu0 0
  %543 = vmatpush1.bf16.msra.mxu0 %v393
  %544 = vmatprep.subr.bf16.mxu0 0
  %545 = vmatpush1.bf16.msra.mxu0 %v394
  %546 = vmatprep.subr.bf16.mxu0 0
  %547 = vmatpush1.bf16.msra.mxu0 %v395
  %548 = vmatprep.subr.bf16.mxu0 0
  %549 = vmatpush1.bf16.msra.mxu0 %v396
  %550 = vmatprep.subr.bf16.mxu0 0
  %551 = vmatpush1.bf16.msra.mxu0 %v397
  %552 = vmatprep.subr.bf16.mxu0 0
  %553 = vmatpush1.bf16.msra.mxu0 %v398
  %554 = vmatprep.subr.bf16.mxu0 0
  %555 = vmatpush1.bf16.msra.mxu0 %v399
  %556 = vmatprep.subr.bf16.mxu0 0
  %557 = vmatpush1.bf16.msra.mxu0 %v400
  %558 = vmatprep.subr.bf16.mxu0 0
  %559 = vmatpush1.bf16.msra.mxu0 %v401
  %560 = vmatprep.subr.bf16.mxu0 0
  %561 = vmatpush1.bf16.msra.mxu0 %v402
  %562 = vmatprep.subr.bf16.mxu0 0
  %563 = vmatpush1.bf16.msra.mxu0 %v403
  %564 = vmatprep.subr.bf16.mxu0 0
  %565 = vmatpush1.bf16.msra.mxu0 %v404
  %566 = vmatprep.subr.bf16.mxu0 0
  %567 = vmatpush1.bf16.msra.mxu0 %v405
  %568 = vmatprep.mubr.bf16.mxu0 %v159
  %569 = vmatmul.mubr.bf16.gmra.mrb[0].mxu0 %v158
  %v570 = vpop.f32.mrb[0].mxu0
  %v571 = vadd.f32 %v530, %v570
  %v572 = vpop.f32.mrb[0].mxu0
  %v573 = vpop.f32.mrb[0].mxu0
  %v574 = vadd.f32 %v533, %v573
  %v575 = vpop.f32.mrb[0].mxu0
  %576 = vdwg.mxu0
  %s577 = scalar_lea.vmem %s2, 384
  %v578 = vld [vmem:[%s577] sm:$0xf]
  %v579 = vld [vmem:[%s577 + $0x4] sm:$0xf]
  %v580 = vld [vmem:[%s577 + $0x8] sm:$0xf]
  %v581 = vld [vmem:[%s577 + $0xc] sm:$0xf]
  %v582 = vld [vmem:[%s577 + $0x10] sm:$0xf]
  %v583 = vld [vmem:[%s577 + $0x14] sm:$0xf]
  %v584 = vld [vmem:[%s577 + $0x18] sm:$0xf]
  %v585 = vld [vmem:[%s577 + $0x1c] sm:$0xf]
  %v586 = vld [vmem:[%s577 + $0x20] sm:$0xf]
  %v587 = vld [vmem:[%s577 + $0x24] sm:$0xf]
  %v588 = vld [vmem:[%s577 + $0x28] sm:$0xf]
  %v589 = vld [vmem:[%s577 + $0x2c] sm:$0xf]
  %v590 = vld [vmem:[%s577 + $0x30] sm:$0xf]
  %v591 = vld [vmem:[%s577 + $0x34] sm:$0xf]
  %v592 = vld [vmem:[%s577 + $0x38] sm:$0xf]
  %v593 = vld [vmem:[%s577 + $0x3c] sm:$0xf]
  %v594 = vld [vmem:[%s577 + $0x40] sm:$0xf]
  %v595 = vld [vmem:[%s577 + $0x44] sm:$0xf]
  %v596 = vld [vmem:[%s577 + $0x48] sm:$0xf]
  %v597 = vld [vmem:[%s577 + $0x4c] sm:$0xf]
  %v598 = vld [vmem:[%s577 + $0x50] sm:$0xf]
  %v599 = vld [vmem:[%s577 + $0x54] sm:$0xf]
  %v600 = vld [vmem:[%s577 + $0x58] sm:$0xf]
  %v601 = vld [vmem:[%s577 + $0x5c] sm:$0xf]
  %v602 = vld [vmem:[%s577 + $0x60] sm:$0xf]
  %v603 = vld [vmem:[%s577 + $0x64] sm:$0xf]
  %v604 = vld [vmem:[%s577 + $0x68] sm:$0xf]
  %v605 = vld [vmem:[%s577 + $0x6c] sm:$0xf]
  %v606 = vld [vmem:[%s577 + $0x70] sm:$0xf]
  %v607 = vld [vmem:[%s577 + $0x74] sm:$0xf]
  %v608 = vld [vmem:[%s577 + $0x78] sm:$0xf]
  %v609 = vld [vmem:[%s577 + $0x7c] sm:$0xf]
  %v610 = vld [vmem:[%s577 + $0x80] sm:$0xf]
  %v611 = vld [vmem:[%s577 + $0x84] sm:$0xf]
  %v612 = vld [vmem:[%s577 + $0x88] sm:$0xf]
  %v613 = vld [vmem:[%s577 + $0x8c] sm:$0xf]
  %v614 = vld [vmem:[%s577 + $0x90] sm:$0xf]
  %v615 = vld [vmem:[%s577 + $0x94] sm:$0xf]
  %v616 = vld [vmem:[%s577 + $0x98] sm:$0xf]
  %v617 = vld [vmem:[%s577 + $0x9c] sm:$0xf]
  %v618 = vld [vmem:[%s577 + $0xa0] sm:$0xf]
  %v619 = vld [vmem:[%s577 + $0xa4] sm:$0xf]
  %v620 = vld [vmem:[%s577 + $0xa8] sm:$0xf]
  %v621 = vld [vmem:[%s577 + $0xac] sm:$0xf]
  %v622 = vld [vmem:[%s577 + $0xb0] sm:$0xf]
  %v623 = vld [vmem:[%s577 + $0xb4] sm:$0xf]
  %v624 = vld [vmem:[%s577 + $0xb8] sm:$0xf]
  %v625 = vld [vmem:[%s577 + $0xbc] sm:$0xf]
  %v626 = vld [vmem:[%s577 + $0xc0] sm:$0xf]
  %v627 = vld [vmem:[%s577 + $0xc4] sm:$0xf]
  %v628 = vld [vmem:[%s577 + $0xc8] sm:$0xf]
  %v629 = vld [vmem:[%s577 + $0xcc] sm:$0xf]
  %v630 = vld [vmem:[%s577 + $0xd0] sm:$0xf]
  %v631 = vld [vmem:[%s577 + $0xd4] sm:$0xf]
  %v632 = vld [vmem:[%s577 + $0xd8] sm:$0xf]
  %v633 = vld [vmem:[%s577 + $0xdc] sm:$0xf]
  %v634 = vld [vmem:[%s577 + $0xe0] sm:$0xf]
  %v635 = vld [vmem:[%s577 + $0xe4] sm:$0xf]
  %v636 = vld [vmem:[%s577 + $0xe8] sm:$0xf]
  %v637 = vld [vmem:[%s577 + $0xec] sm:$0xf]
  %v638 = vld [vmem:[%s577 + $0xf0] sm:$0xf]
  %v639 = vld [vmem:[%s577 + $0xf4] sm:$0xf]
  %v640 = vld [vmem:[%s577 + $0xf8] sm:$0xf]
  %v641 = vld [vmem:[%s577 + $0xfc] sm:$0xf]
  %v642 = vld [vmem:[%s577 + $0x100] sm:$0xf]
  %v643 = vld [vmem:[%s577 + $0x104] sm:$0xf]
  %v644 = vld [vmem:[%s577 + $0x108] sm:$0xf]
  %v645 = vld [vmem:[%s577 + $0x10c] sm:$0xf]
  %v646 = vld [vmem:[%s577 + $0x110] sm:$0xf]
  %v647 = vld [vmem:[%s577 + $0x114] sm:$0xf]
  %v648 = vld [vmem:[%s577 + $0x118] sm:$0xf]
  %v649 = vld [vmem:[%s577 + $0x11c] sm:$0xf]
  %v650 = vld [vmem:[%s577 + $0x120] sm:$0xf]
  %v651 = vld [vmem:[%s577 + $0x124] sm:$0xf]
  %v652 = vld [vmem:[%s577 + $0x128] sm:$0xf]
  %v653 = vld [vmem:[%s577 + $0x12c] sm:$0xf]
  %v654 = vld [vmem:[%s577 + $0x130] sm:$0xf]
  %v655 = vld [vmem:[%s577 + $0x134] sm:$0xf]
  %v656 = vld [vmem:[%s577 + $0x138] sm:$0xf]
  %v657 = vld [vmem:[%s577 + $0x13c] sm:$0xf]
  %v658 = vld [vmem:[%s577 + $0x140] sm:$0xf]
  %v659 = vld [vmem:[%s577 + $0x144] sm:$0xf]
  %v660 = vld [vmem:[%s577 + $0x148] sm:$0xf]
  %v661 = vld [vmem:[%s577 + $0x14c] sm:$0xf]
  %v662 = vld [vmem:[%s577 + $0x150] sm:$0xf]
  %v663 = vld [vmem:[%s577 + $0x154] sm:$0xf]
  %v664 = vld [vmem:[%s577 + $0x158] sm:$0xf]
  %v665 = vld [vmem:[%s577 + $0x15c] sm:$0xf]
  %v666 = vld [vmem:[%s577 + $0x160] sm:$0xf]
  %v667 = vld [vmem:[%s577 + $0x164] sm:$0xf]
  %v668 = vld [vmem:[%s577 + $0x168] sm:$0xf]
  %v669 = vld [vmem:[%s577 + $0x16c] sm:$0xf]
  %v670 = vld [vmem:[%s577 + $0x170] sm:$0xf]
  %v671 = vld [vmem:[%s577 + $0x174] sm:$0xf]
  %v672 = vld [vmem:[%s577 + $0x178] sm:$0xf]
  %v673 = vld [vmem:[%s577 + $0x17c] sm:$0xf]
  %v674 = vlaneseq
  %v675 = vshrl.u32 %v674, 7
  %v676 = vsub.s32 1, %v675
  %v677 = vrot.slane %v35, %v676
  %v684 = vunpack.c.l.b16 %v24
  %v685 = vunpack.c.h.b16 %v24
  %v686 = vunpack.c.l.b16 %v25
  %v687 = vunpack.c.h.b16 %v25
  %v688 = vunpack.c.l.b16 %v26
  %v689 = vunpack.c.h.b16 %v26
  %v690 = vunpack.c.l.b16 %v30
  %v691 = vunpack.c.h.b16 %v30
  %v692 = vunpack.c.l.b16 %v31
  %v693 = vunpack.c.h.b16 %v31
  %v694 = vunpack.c.l.b16 %v32
  %v695 = vunpack.c.h.b16 %v32
  %v696 = vpack.c.b16 %v690, %v684
  %v697 = vpack.c.b16 %v691, %v685
  %v698 = vpack.c.b16 %v692, %v686
  %v699 = vpack.c.b16 %v693, %v687
  %v700 = vpack.c.b16 %v694, %v688
  %v701 = vpack.c.b16 %v695, %v689
  %v804 = vunpack.c.l.b16 %v578
  %v805 = vunpack.c.l.b16 %v579
  %v806 = vunpack.c.l.b16 %v580
  %v807 = vunpack.c.l.b16 %v581
  %v808 = vunpack.c.l.b16 %v582
  %v809 = vunpack.c.l.b16 %v583
  %v810 = vunpack.c.l.b16 %v584
  %v811 = vunpack.c.l.b16 %v585
  %v812 = vunpack.c.l.b16 %v586
  %v813 = vunpack.c.l.b16 %v587
  %v814 = vunpack.c.l.b16 %v588
  %v815 = vunpack.c.l.b16 %v589
  %v816 = vunpack.c.l.b16 %v590
  %v817 = vunpack.c.l.b16 %v591
  %v818 = vunpack.c.l.b16 %v592
  %v819 = vunpack.c.l.b16 %v593
  %v820 = vunpack.c.l.b16 %v594
  %v821 = vunpack.c.l.b16 %v595
  %v822 = vunpack.c.l.b16 %v596
  %v823 = vunpack.c.l.b16 %v597
  %v824 = vunpack.c.l.b16 %v598
  %v825 = vunpack.c.l.b16 %v599
  %v826 = vunpack.c.l.b16 %v600
  %v827 = vunpack.c.l.b16 %v601
  %v828 = vunpack.c.l.b16 %v602
  %v829 = vunpack.c.l.b16 %v603
  %v830 = vunpack.c.l.b16 %v604
  %v831 = vunpack.c.l.b16 %v605
  %v832 = vunpack.c.l.b16 %v606
  %v833 = vunpack.c.l.b16 %v607
  %v834 = vunpack.c.l.b16 %v608
  %v835 = vunpack.c.l.b16 %v609
  %v836 = vunpack.c.l.b16 %v610
  %v837 = vunpack.c.l.b16 %v611
  %v838 = vunpack.c.l.b16 %v612
  %v839 = vunpack.c.l.b16 %v613
  %v840 = vunpack.c.l.b16 %v614
  %v841 = vunpack.c.l.b16 %v615
  %v842 = vunpack.c.l.b16 %v616
  %v843 = vunpack.c.l.b16 %v617
  %v844 = vunpack.c.l.b16 %v618
  %v845 = vunpack.c.l.b16 %v619
  %v846 = vunpack.c.l.b16 %v620
  %v847 = vunpack.c.l.b16 %v621
  %v848 = vunpack.c.l.b16 %v622
  %v849 = vunpack.c.l.b16 %v623
  %v850 = vunpack.c.l.b16 %v624
  %v851 = vunpack.c.l.b16 %v625
  %v852 = vunpack.c.l.b16 %v626
  %v853 = vunpack.c.l.b16 %v627
  %v854 = vunpack.c.l.b16 %v628
  %v855 = vunpack.c.l.b16 %v629
  %v856 = vunpack.c.l.b16 %v630
  %v857 = vunpack.c.l.b16 %v631
  %v858 = vunpack.c.l.b16 %v632
  %v859 = vunpack.c.l.b16 %v633
  %v860 = vunpack.c.l.b16 %v634
  %v861 = vunpack.c.l.b16 %v635
  %v862 = vunpack.c.l.b16 %v636
  %v863 = vunpack.c.l.b16 %v637
  %v864 = vunpack.c.l.b16 %v638
  %v865 = vunpack.c.l.b16 %v639
  %v866 = vunpack.c.l.b16 %v640
  %v867 = vunpack.c.l.b16 %v641
  %v868 = vunpack.c.l.b16 %v642
  %v869 = vunpack.c.l.b16 %v643
  %v870 = vunpack.c.l.b16 %v644
  %v871 = vunpack.c.l.b16 %v645
  %v872 = vunpack.c.l.b16 %v646
  %v873 = vunpack.c.l.b16 %v647
  %v874 = vunpack.c.l.b16 %v648
  %v875 = vunpack.c.l.b16 %v649
  %v876 = vunpack.c.l.b16 %v650
  %v877 = vunpack.c.l.b16 %v651
  %v878 = vunpack.c.l.b16 %v652
  %v879 = vunpack.c.l.b16 %v653
  %v880 = vunpack.c.l.b16 %v654
  %v881 = vunpack.c.l.b16 %v655
  %v882 = vunpack.c.l.b16 %v656
  %v883 = vunpack.c.l.b16 %v657
  %v884 = vunpack.c.l.b16 %v658
  %v885 = vunpack.c.l.b16 %v659
  %v886 = vunpack.c.l.b16 %v660
  %v887 = vunpack.c.l.b16 %v661
  %v888 = vunpack.c.l.b16 %v662
  %v889 = vunpack.c.l.b16 %v663
  %v890 = vunpack.c.l.b16 %v664
  %v891 = vunpack.c.l.b16 %v665
  %v892 = vunpack.c.l.b16 %v666
  %v893 = vunpack.c.l.b16 %v667
  %v894 = vunpack.c.l.b16 %v668
  %v895 = vunpack.c.l.b16 %v669
  %v896 = vunpack.c.l.b16 %v670
  %v897 = vunpack.c.l.b16 %v671
  %v898 = vunpack.c.l.b16 %v672
  %v899 = vunpack.c.l.b16 %v673
  %v900 = vpack.c.b16 %v805, %v804
  %v901 = vpack.c.b16 %v807, %v806
  %v902 = vpack.c.b16 %v809, %v808
  %v903 = vpack.c.b16 %v811, %v810
  %v904 = vpack.c.b16 %v813, %v812
  %v905 = vpack.c.b16 %v815, %v814
  %v906 = vpack.c.b16 %v817, %v816
  %v907 = vpack.c.b16 %v819, %v818
  %v908 = vpack.c.b16 %v821, %v820
  %v909 = vpack.c.b16 %v823, %v822
  %v910 = vpack.c.b16 %v825, %v824
  %v911 = vpack.c.b16 %v827, %v826
  %v912 = vpack.c.b16 %v829, %v828
  %v913 = vpack.c.b16 %v831, %v830
  %v914 = vpack.c.b16 %v833, %v832
  %v915 = vpack.c.b16 %v835, %v834
  %v916 = vpack.c.b16 %v837, %v836
  %v917 = vpack.c.b16 %v839, %v838
  %v918 = vpack.c.b16 %v841, %v840
  %v919 = vpack.c.b16 %v843, %v842
  %v920 = vpack.c.b16 %v845, %v844
  %v921 = vpack.c.b16 %v847, %v846
  %v922 = vpack.c.b16 %v849, %v848
  %v923 = vpack.c.b16 %v851, %v850
  %v924 = vpack.c.b16 %v853, %v852
  %v925 = vpack.c.b16 %v855, %v854
  %v926 = vpack.c.b16 %v857, %v856
  %v927 = vpack.c.b16 %v859, %v858
  %v928 = vpack.c.b16 %v861, %v860
  %v929 = vpack.c.b16 %v863, %v862
  %v930 = vpack.c.b16 %v865, %v864
  %v931 = vpack.c.b16 %v867, %v866
  %v932 = vpack.c.b16 %v869, %v868
  %v933 = vpack.c.b16 %v871, %v870
  %v934 = vpack.c.b16 %v873, %v872
  %v935 = vpack.c.b16 %v875, %v874
  %v936 = vpack.c.b16 %v877, %v876
  %v937 = vpack.c.b16 %v879, %v878
  %v938 = vpack.c.b16 %v881, %v880
  %v939 = vpack.c.b16 %v883, %v882
  %v940 = vpack.c.b16 %v885, %v884
  %v941 = vpack.c.b16 %v887, %v886
  %v942 = vpack.c.b16 %v889, %v888
  %v943 = vpack.c.b16 %v891, %v890
  %v944 = vpack.c.b16 %v893, %v892
  %v945 = vpack.c.b16 %v895, %v894
  %v946 = vpack.c.b16 %v897, %v896
  %v947 = vpack.c.b16 %v899, %v898
  %996 = vmatprep.subr.bf16.mxu0 0
  %997 = vmatpush1.bf16.msra.mxu0 %v900
  %998 = vmatprep.subr.bf16.mxu0 0
  %999 = vmatpush1.bf16.msra.mxu0 %v901
  %1000 = vmatprep.subr.bf16.mxu0 0
  %1001 = vmatpush1.bf16.msra.mxu0 %v902
  %1002 = vmatprep.subr.bf16.mxu0 0
  %1003 = vmatpush1.bf16.msra.mxu0 %v903
  %1004 = vmatprep.subr.bf16.mxu0 0
  %1005 = vmatpush1.bf16.msra.mxu0 %v904
  %1006 = vmatprep.subr.bf16.mxu0 0
  %1007 = vmatpush1.bf16.msra.mxu0 %v905
  %1008 = vmatprep.subr.bf16.mxu0 0
  %1009 = vmatpush1.bf16.msra.mxu0 %v906
  %1010 = vmatprep.subr.bf16.mxu0 0
  %1011 = vmatpush1.bf16.msra.mxu0 %v907
  %1012 = vmatprep.subr.bf16.mxu0 0
  %1013 = vmatpush1.bf16.msra.mxu0 %v908
  %1014 = vmatprep.subr.bf16.mxu0 0
  %1015 = vmatpush1.bf16.msra.mxu0 %v909
  %1016 = vmatprep.subr.bf16.mxu0 0
  %1017 = vmatpush1.bf16.msra.mxu0 %v910
  %1018 = vmatprep.subr.bf16.mxu0 0
  %1019 = vmatpush1.bf16.msra.mxu0 %v911
  %1020 = vmatprep.subr.bf16.mxu0 0
  %1021 = vmatpush1.bf16.msra.mxu0 %v912
  %1022 = vmatprep.subr.bf16.mxu0 0
  %1023 = vmatpush1.bf16.msra.mxu0 %v913
  %1024 = vmatprep.subr.bf16.mxu0 0
  %1025 = vmatpush1.bf16.msra.mxu0 %v914
  %1026 = vmatprep.subr.bf16.mxu0 0
  %1027 = vmatpush1.bf16.msra.mxu0 %v915
  %1028 = vmatprep.mubr.bf16.mxu0 %v697
  %1029 = vmatmul.mubr.bf16.gmra.mrb[0].mxu0 %v696
  %v1030 = vpop.f32.mrb[0].mxu0
  %v1031 = vadd.f32 %v677, %v1030
  %v1032 = vpop.f32.mrb[0].mxu0
  %v1033 = vpop.f32.mrb[0].mxu0
  %v1034 = vadd.f32 %v677, %v1033
  %v1035 = vpop.f32.mrb[0].mxu0
  %1036 = vdwg.mxu0
  %1037 = vmatprep.subr.bf16.mxu0 0
  %1038 = vmatpush1.bf16.msra.mxu0 %v916
  %1039 = vmatprep.subr.bf16.mxu0 0
  %1040 = vmatpush1.bf16.msra.mxu0 %v917
  %1041 = vmatprep.subr.bf16.mxu0 0
  %1042 = vmatpush1.bf16.msra.mxu0 %v918
  %1043 = vmatprep.subr.bf16.mxu0 0
  %1044 = vmatpush1.bf16.msra.mxu0 %v919
  %1045 = vmatprep.subr.bf16.mxu0 0
  %1046 = vmatpush1.bf16.msra.mxu0 %v920
  %1047 = vmatprep.subr.bf16.mxu0 0
  %1048 = vmatpush1.bf16.msra.mxu0 %v921
  %1049 = vmatprep.subr.bf16.mxu0 0
  %1050 = vmatpush1.bf16.msra.mxu0 %v922
  %1051 = vmatprep.subr.bf16.mxu0 0
  %1052 = vmatpush1.bf16.msra.mxu0 %v923
  %1053 = vmatprep.subr.bf16.mxu0 0
  %1054 = vmatpush1.bf16.msra.mxu0 %v924
  %1055 = vmatprep.subr.bf16.mxu0 0
  %1056 = vmatpush1.bf16.msra.mxu0 %v925
  %1057 = vmatprep.subr.bf16.mxu0 0
  %1058 = vmatpush1.bf16.msra.mxu0 %v926
  %1059 = vmatprep.subr.bf16.mxu0 0
  %1060 = vmatpush1.bf16.msra.mxu0 %v927
  %1061 = vmatprep.subr.bf16.mxu0 0
  %1062 = vmatpush1.bf16.msra.mxu0 %v928
  %1063 = vmatprep.subr.bf16.mxu0 0
  %1064 = vmatpush1.bf16.msra.mxu0 %v929
  %1065 = vmatprep.subr.bf16.mxu0 0
  %1066 = vmatpush1.bf16.msra.mxu0 %v930
  %1067 = vmatprep.subr.bf16.mxu0 0
  %1068 = vmatpush1.bf16.msra.mxu0 %v931
  %1069 = vmatprep.mubr.bf16.mxu0 %v699
  %1070 = vmatmul.mubr.bf16.gmra.mrb[0].mxu0 %v698
  %v1071 = vpop.f32.mrb[0].mxu0
  %v1072 = vadd.f32 %v1031, %v1071
  %v1073 = vpop.f32.mrb[0].mxu0
  %v1074 = vpop.f32.mrb[0].mxu0
  %v1075 = vadd.f32 %v1034, %v1074
  %v1076 = vpop.f32.mrb[0].mxu0
  %1077 = vdwg.mxu0
  %1078 = vmatprep.subr.bf16.mxu0 0
  %1079 = vmatpush1.bf16.msra.mxu0 %v932
  %1080 = vmatprep.subr.bf16.mxu0 0
  %1081 = vmatpush1.bf16.msra.mxu0 %v933
  %1082 = vmatprep.subr.bf16.mxu0 0
  %1083 = vmatpush1.bf16.msra.mxu0 %v934
  %1084 = vmatprep.subr.bf16.mxu0 0
  %1085 = vmatpush1.bf16.msra.mxu0 %v935
  %1086 = vmatprep.subr.bf16.mxu0 0
  %1087 = vmatpush1.bf16.msra.mxu0 %v936
  %1088 = vmatprep.subr.bf16.mxu0 0
  %1089 = vmatpush1.bf16.msra.mxu0 %v937
  %1090 = vmatprep.subr.bf16.mxu0 0
  %1091 = vmatpush1.bf16.msra.mxu0 %v938
  %1092 = vmatprep.subr.bf16.mxu0 0
  %1093 = vmatpush1.bf16.msra.mxu0 %v939
  %1094 = vmatprep.subr.bf16.mxu0 0
  %1095 = vmatpush1.bf16.msra.mxu0 %v940
  %1096 = vmatprep.subr.bf16.mxu0 0
  %1097 = vmatpush1.bf16.msra.mxu0 %v941
  %1098 = vmatprep.subr.bf16.mxu0 0
  %1099 = vmatpush1.bf16.msra.mxu0 %v942
  %1100 = vmatprep.subr.bf16.mxu0 0
  %1101 = vmatpush1.bf16.msra.mxu0 %v943
  %1102 = vmatprep.subr.bf16.mxu0 0
  %1103 = vmatpush1.bf16.msra.mxu0 %v944
  %1104 = vmatprep.subr.bf16.mxu0 0
  %1105 = vmatpush1.bf16.msra.mxu0 %v945
  %1106 = vmatprep.subr.bf16.mxu0 0
  %1107 = vmatpush1.bf16.msra.mxu0 %v946
  %1108 = vmatprep.subr.bf16.mxu0 0
  %1109 = vmatpush1.bf16.msra.mxu0 %v947
  %1110 = vmatprep.mubr.bf16.mxu0 %v701
  %1111 = vmatmul.mubr.bf16.gmra.mrb[0].mxu0 %v700
  %v1112 = vpop.f32.mrb[0].mxu0
  %v1113 = vadd.f32 %v1072, %v1112
  %v1114 = vpop.f32.mrb[0].mxu0
  %v1115 = vpop.f32.mrb[0].mxu0
  %v1116 = vadd.f32 %v1075, %v1115
  %v1117 = vpop.f32.mrb[0].mxu0
  %1118 = vdwg.mxu0
  %v1119 = vld [vmem:[%s3] sm:$0xff]
  %v1120 = vld [vmem:[%s3 + $0x8] sm:$0xff]
  %v1121 = vld [vmem:[%s3 + $0x10] sm:$0xff]
  %v1122 = vld [vmem:[%s3 + $0x18] sm:$0xff]
  %v1123 = vld [vmem:[%s3 + $0x20] sm:$0xff]
  %v1124 = vld [vmem:[%s3 + $0x28] sm:$0xff]
  %v1125 = vld [vmem:[%s3 + $0x30] sm:$0xff]
  %v1126 = vld [vmem:[%s3 + $0x38] sm:$0xff]
  %v1127 = vld [vmem:[%s3 + $0x40] sm:$0xff]
  %v1128 = vld [vmem:[%s3 + $0x48] sm:$0xff]
  %v1129 = vld [vmem:[%s3 + $0x50] sm:$0xff]
  %v1130 = vld [vmem:[%s3 + $0x58] sm:$0xff]
  %v1131 = vld [vmem:[%s3 + $0x60] sm:$0xff]
  %v1132 = vld [vmem:[%s3 + $0x68] sm:$0xff]
  %v1133 = vld [vmem:[%s3 + $0x70] sm:$0xff]
  %v1134 = vld [vmem:[%s3 + $0x78] sm:$0xff]
  %1135 = vmatprep.subr.mxu0 0.0
  %1136 = vmatpush1.msra.mxu0 %v1119
  %1137 = vmatprep.subr.mxu0 0.0
  %1138 = vmatpush1.msra.mxu0 %v1120
  %1139 = vmatprep.subr.mxu0 0.0
  %1140 = vmatpush1.msra.mxu0 %v1121
  %1141 = vmatprep.subr.mxu0 0.0
  %1142 = vmatpush1.msra.mxu0 %v1122
  %1143 = vmatprep.subr.mxu0 0.0
  %1144 = vmatpush1.msra.mxu0 %v1123
  %1145 = vmatprep.subr.mxu0 0.0
  %1146 = vmatpush1.msra.mxu0 %v1124
  %1147 = vmatprep.subr.mxu0 0.0
  %1148 = vmatpush1.msra.mxu0 %v1125
  %1149 = vmatprep.subr.mxu0 0.0
  %1150 = vmatpush1.msra.mxu0 %v1126
  %1151 = vmatprep.subr.mxu0 0.0
  %1152 = vmatpush1.msra.mxu0 %v1127
  %1153 = vmatprep.subr.mxu0 0.0
  %1154 = vmatpush1.msra.mxu0 %v1128
  %1155 = vmatprep.subr.mxu0 0.0
  %1156 = vmatpush1.msra.mxu0 %v1129
  %1157 = vmatprep.subr.mxu0 0.0
  %1158 = vmatpush1.msra.mxu0 %v1130
  %1159 = vmatprep.subr.mxu0 0.0
  %1160 = vmatpush1.msra.mxu0 %v1131
  %1161 = vmatprep.subr.mxu0 0.0
  %1162 = vmatpush1.msra.mxu0 %v1132
  %1163 = vmatprep.subr.mxu0 0.0
  %1164 = vmatpush1.msra.mxu0 %v1133
  %1165 = vmatprep.subr.mxu0 0.0
  %1166 = vmatpush1.msra.mxu0 %v1134
  %1167 = vmatprep.subr.mxu0 0.0
  %1168 = vmatpush1.msra.mxu0 0.0
  %1169 = vmatprep.subr.mxu0 0.0
  %1170 = vmatpush1.msra.mxu0 0.0
  %1171 = vmatprep.subr.mxu0 0.0
  %1172 = vmatpush1.msra.mxu0 0.0
  %1173 = vmatprep.subr.mxu0 0.0
  %1174 = vmatpush1.msra.mxu0 0.0
  %1175 = vmatprep.subr.mxu0 0.0
  %1176 = vmatpush1.msra.mxu0 0.0
  %1177 = vmatprep.subr.mxu0 0.0
  %1178 = vmatpush1.msra.mxu0 0.0
  %1179 = vmatprep.subr.mxu0 0.0
  %1180 = vmatpush1.msra.mxu0 0.0
  %1181 = vmatprep.subr.mxu0 0.0
  %1182 = vmatpush1.msra.mxu0 0.0
  %1183 = vmatprep.subr.mxu0 0.0
  %1184 = vmatpush1.msra.mxu0 0.0
  %1185 = vmatprep.subr.mxu0 0.0
  %1186 = vmatpush1.msra.mxu0 0.0
  %1187 = vmatprep.subr.mxu0 0.0
  %1188 = vmatpush1.msra.mxu0 0.0
  %1189 = vmatprep.subr.mxu0 0.0
  %1190 = vmatpush1.msra.mxu0 0.0
  %1191 = vmatprep.subr.mxu0 0.0
  %1192 = vmatpush1.msra.mxu0 0.0
  %1193 = vmatprep.subr.mxu0 0.0
  %1194 = vmatpush1.msra.mxu0 0.0
  %1195 = vmatprep.subr.mxu0 0.0
  %1196 = vmatpush1.msra.mxu0 0.0
  %1197 = vmatprep.subr.mxu0 0.0
  %1198 = vmatpush1.msra.mxu0 0.0
  %1199 = vmatprep.mubr.f32.mxu0 0.0
  %1200 = vmatmul.mubr.f32.gmra.mrb[0].mxu0 %v571
  %v1201 = vpop.f32.mrb[0].mxu0
  %v1202 = vadd.f32 0.0, %v1201
  %v1203 = vpop.f32.mrb[0].mxu0
  %1204 = vmatprep.mubr.f32.mxu0 0.0
  %1205 = vmatmul.mubr.f32.gmra.mrb[0].mxu0 %v574
  %v1206 = vpop.f32.mrb[0].mxu0
  %v1207 = vadd.f32 0.0, %v1206
  %v1208 = vpop.f32.mrb[0].mxu0
  %1209 = vdwg.mxu0
  %s1210 = scalar_lea.vmem %s3, 128
  %v1211 = vld [vmem:[%s1210] sm:$0xff]
  %v1212 = vld [vmem:[%s1210 + $0x8] sm:$0xff]
  %v1213 = vld [vmem:[%s1210 + $0x10] sm:$0xff]
  %v1214 = vld [vmem:[%s1210 + $0x18] sm:$0xff]
  %v1215 = vld [vmem:[%s1210 + $0x20] sm:$0xff]
  %v1216 = vld [vmem:[%s1210 + $0x28] sm:$0xff]
  %v1217 = vld [vmem:[%s1210 + $0x30] sm:$0xff]
  %v1218 = vld [vmem:[%s1210 + $0x38] sm:$0xff]
  %v1219 = vld [vmem:[%s1210 + $0x40] sm:$0xff]
  %v1220 = vld [vmem:[%s1210 + $0x48] sm:$0xff]
  %v1221 = vld [vmem:[%s1210 + $0x50] sm:$0xff]
  %v1222 = vld [vmem:[%s1210 + $0x58] sm:$0xff]
  %v1223 = vld [vmem:[%s1210 + $0x60] sm:$0xff]
  %v1224 = vld [vmem:[%s1210 + $0x68] sm:$0xff]
  %v1225 = vld [vmem:[%s1210 + $0x70] sm:$0xff]
  %v1226 = vld [vmem:[%s1210 + $0x78] sm:$0xff]
  %1227 = vmatprep.subr.mxu0 0.0
  %1228 = vmatpush1.msra.mxu0 %v1211
  %1229 = vmatprep.subr.mxu0 0.0
  %1230 = vmatpush1.msra.mxu0 %v1212
  %1231 = vmatprep.subr.mxu0 0.0
  %1232 = vmatpush1.msra.mxu0 %v1213
  %1233 = vmatprep.subr.mxu0 0.0
  %1234 = vmatpush1.msra.mxu0 %v1214
  %1235 = vmatprep.subr.mxu0 0.0
  %1236 = vmatpush1.msra.mxu0 %v1215
  %1237 = vmatprep.subr.mxu0 0.0
  %1238 = vmatpush1.msra.mxu0 %v1216
  %1239 = vmatprep.subr.mxu0 0.0
  %1240 = vmatpush1.msra.mxu0 %v1217
  %1241 = vmatprep.subr.mxu0 0.0
  %1242 = vmatpush1.msra.mxu0 %v1218
  %1243 = vmatprep.subr.mxu0 0.0
  %1244 = vmatpush1.msra.mxu0 %v1219
  %1245 = vmatprep.subr.mxu0 0.0
  %1246 = vmatpush1.msra.mxu0 %v1220
  %1247 = vmatprep.subr.mxu0 0.0
  %1248 = vmatpush1.msra.mxu0 %v1221
  %1249 = vmatprep.subr.mxu0 0.0
  %1250 = vmatpush1.msra.mxu0 %v1222
  %1251 = vmatprep.subr.mxu0 0.0
  %1252 = vmatpush1.msra.mxu0 %v1223
  %1253 = vmatprep.subr.mxu0 0.0
  %1254 = vmatpush1.msra.mxu0 %v1224
  %1255 = vmatprep.subr.mxu0 0.0
  %1256 = vmatpush1.msra.mxu0 %v1225
  %1257 = vmatprep.subr.mxu0 0.0
  %1258 = vmatpush1.msra.mxu0 %v1226
  %1259 = vmatprep.subr.mxu0 0.0
  %1260 = vmatpush1.msra.mxu0 0.0
  %1261 = vmatprep.subr.mxu0 0.0
  %1262 = vmatpush1.msra.mxu0 0.0
  %1263 = vmatprep.subr.mxu0 0.0
  %1264 = vmatpush1.msra.mxu0 0.0
  %1265 = vmatprep.subr.mxu0 0.0
  %1266 = vmatpush1.msra.mxu0 0.0
  %1267 = vmatprep.subr.mxu0 0.0
  %1268 = vmatpush1.msra.mxu0 0.0
  %1269 = vmatprep.subr.mxu0 0.0
  %1270 = vmatpush1.msra.mxu0 0.0
  %1271 = vmatprep.subr.mxu0 0.0
  %1272 = vmatpush1.msra.mxu0 0.0
  %1273 = vmatprep.subr.mxu0 0.0
  %1274 = vmatpush1.msra.mxu0 0.0
  %1275 = vmatprep.subr.mxu0 0.0
  %1276 = vmatpush1.msra.mxu0 0.0
  %1277 = vmatprep.subr.mxu0 0.0
  %1278 = vmatpush1.msra.mxu0 0.0
  %1279 = vmatprep.subr.mxu0 0.0
  %1280 = vmatpush1.msra.mxu0 0.0
  %1281 = vmatprep.subr.mxu0 0.0
  %1282 = vmatpush1.msra.mxu0 0.0
  %1283 = vmatprep.subr.mxu0 0.0
  %1284 = vmatpush1.msra.mxu0 0.0
  %1285 = vmatprep.subr.mxu0 0.0
  %1286 = vmatpush1.msra.mxu0 0.0
  %1287 = vmatprep.subr.mxu0 0.0
  %1288 = vmatpush1.msra.mxu0 0.0
  %1289 = vmatprep.subr.mxu0 0.0
  %1290 = vmatpush1.msra.mxu0 0.0
  %1291 = vmatprep.mubr.f32.mxu0 0.0
  %1292 = vmatmul.mubr.f32.gmra.mrb[0].mxu0 %v1113
  %v1293 = vpop.f32.mrb[0].mxu0
  %v1294 = vadd.f32 0.0, %v1293
  %v1295 = vpop.f32.mrb[0].mxu0
  %1296 = vmatprep.mubr.f32.mxu0 0.0
  %1297 = vmatmul.mubr.f32.gmra.mrb[0].mxu0 %v1116
  %v1298 = vpop.f32.mrb[0].mxu0
  %v1299 = vadd.f32 0.0, %v1298
  %v1300 = vpop.f32.mrb[0].mxu0
  %1301 = vdwg.mxu0
  %v1302 = vmul.f32 %v571, %v571
  %v1303 = vmul.f32 %v574, %v574
  %s1304 = scalar_lea.vmem %s3, 256
  %v1305 = vld [vmem:[%s1304] sm:$0xff]
  %v1306 = vld [vmem:[%s1304 + $0x8] sm:$0xff]
  %v1307 = vld [vmem:[%s1304 + $0x10] sm:$0xff]
  %v1308 = vld [vmem:[%s1304 + $0x18] sm:$0xff]
  %v1309 = vld [vmem:[%s1304 + $0x20] sm:$0xff]
  %v1310 = vld [vmem:[%s1304 + $0x28] sm:$0xff]
  %v1311 = vld [vmem:[%s1304 + $0x30] sm:$0xff]
  %v1312 = vld [vmem:[%s1304 + $0x38] sm:$0xff]
  %v1313 = vld [vmem:[%s1304 + $0x40] sm:$0xff]
  %v1314 = vld [vmem:[%s1304 + $0x48] sm:$0xff]
  %v1315 = vld [vmem:[%s1304 + $0x50] sm:$0xff]
  %v1316 = vld [vmem:[%s1304 + $0x58] sm:$0xff]
  %v1317 = vld [vmem:[%s1304 + $0x60] sm:$0xff]
  %v1318 = vld [vmem:[%s1304 + $0x68] sm:$0xff]
  %v1319 = vld [vmem:[%s1304 + $0x70] sm:$0xff]
  %v1320 = vld [vmem:[%s1304 + $0x78] sm:$0xff]
  %v1321 = vmul.f32 %v1113, %v1113
  %v1322 = vmul.f32 %v1116, %v1116
  %s1323 = scalar_lea.vmem %s3, 384
  %v1324 = vld [vmem:[%s1323] sm:$0xff]
  %v1325 = vld [vmem:[%s1323 + $0x8] sm:$0xff]
  %v1326 = vld [vmem:[%s1323 + $0x10] sm:$0xff]
  %v1327 = vld [vmem:[%s1323 + $0x18] sm:$0xff]
  %v1328 = vld [vmem:[%s1323 + $0x20] sm:$0xff]
  %v1329 = vld [vmem:[%s1323 + $0x28] sm:$0xff]
  %v1330 = vld [vmem:[%s1323 + $0x30] sm:$0xff]
  %v1331 = vld [vmem:[%s1323 + $0x38] sm:$0xff]
  %v1332 = vld [vmem:[%s1323 + $0x40] sm:$0xff]
  %v1333 = vld [vmem:[%s1323 + $0x48] sm:$0xff]
  %v1334 = vld [vmem:[%s1323 + $0x50] sm:$0xff]
  %v1335 = vld [vmem:[%s1323 + $0x58] sm:$0xff]
  %v1336 = vld [vmem:[%s1323 + $0x60] sm:$0xff]
  %v1337 = vld [vmem:[%s1323 + $0x68] sm:$0xff]
  %v1338 = vld [vmem:[%s1323 + $0x70] sm:$0xff]
  %v1339 = vld [vmem:[%s1323 + $0x78] sm:$0xff]
  %1340 = vmatprep.subr.mxu0 0.0
  %1341 = vmatpush1.msra.mxu0 %v1324
  %1342 = vmatprep.subr.mxu0 0.0
  %1343 = vmatpush1.msra.mxu0 %v1325
  %1344 = vmatprep.subr.mxu0 0.0
  %1345 = vmatpush1.msra.mxu0 %v1326
  %1346 = vmatprep.subr.mxu0 0.0
  %1347 = vmatpush1.msra.mxu0 %v1327
  %1348 = vmatprep.subr.mxu0 0.0
  %1349 = vmatpush1.msra.mxu0 %v1328
  %1350 = vmatprep.subr.mxu0 0.0
  %1351 = vmatpush1.msra.mxu0 %v1329
  %1352 = vmatprep.subr.mxu0 0.0
  %1353 = vmatpush1.msra.mxu0 %v1330
  %1354 = vmatprep.subr.mxu0 0.0
  %1355 = vmatpush1.msra.mxu0 %v1331
  %1356 = vmatprep.subr.mxu0 0.0
  %1357 = vmatpush1.msra.mxu0 %v1332
  %1358 = vmatprep.subr.mxu0 0.0
  %1359 = vmatpush1.msra.mxu0 %v1333
  %1360 = vmatprep.subr.mxu0 0.0
  %1361 = vmatpush1.msra.mxu0 %v1334
  %1362 = vmatprep.subr.mxu0 0.0
  %1363 = vmatpush1.msra.mxu0 %v1335
  %1364 = vmatprep.subr.mxu0 0.0
  %1365 = vmatpush1.msra.mxu0 %v1336
  %1366 = vmatprep.subr.mxu0 0.0
  %1367 = vmatpush1.msra.mxu0 %v1337
  %1368 = vmatprep.subr.mxu0 0.0
  %1369 = vmatpush1.msra.mxu0 %v1338
  %1370 = vmatprep.subr.mxu0 0.0
  %1371 = vmatpush1.msra.mxu0 %v1339
  %1372 = vmatprep.subr.mxu0 0.0
  %1373 = vmatpush1.msra.mxu0 0.0
  %1374 = vmatprep.subr.mxu0 0.0
  %1375 = vmatpush1.msra.mxu0 0.0
  %1376 = vmatprep.subr.mxu0 0.0
  %1377 = vmatpush1.msra.mxu0 0.0
  %1378 = vmatprep.subr.mxu0 0.0
  %1379 = vmatpush1.msra.mxu0 0.0
  %1380 = vmatprep.subr.mxu0 0.0
  %1381 = vmatpush1.msra.mxu0 0.0
  %1382 = vmatprep.subr.mxu0 0.0
  %1383 = vmatpush1.msra.mxu0 0.0
  %1384 = vmatprep.subr.mxu0 0.0
  %1385 = vmatpush1.msra.mxu0 0.0
  %1386 = vmatprep.subr.mxu0 0.0
  %1387 = vmatpush1.msra.mxu0 0.0
  %1388 = vmatprep.subr.mxu0 0.0
  %1389 = vmatpush1.msra.mxu0 0.0
  %1390 = vmatprep.subr.mxu0 0.0
  %1391 = vmatpush1.msra.mxu0 0.0
  %1392 = vmatprep.subr.mxu0 0.0
  %1393 = vmatpush1.msra.mxu0 0.0
  %1394 = vmatprep.subr.mxu0 0.0
  %1395 = vmatpush1.msra.mxu0 0.0
  %1396 = vmatprep.subr.mxu0 0.0
  %1397 = vmatpush1.msra.mxu0 0.0
  %1398 = vmatprep.subr.mxu0 0.0
  %1399 = vmatpush1.msra.mxu0 0.0
  %1400 = vmatprep.subr.mxu0 0.0
  %1401 = vmatpush1.msra.mxu0 0.0
  %1402 = vmatprep.subr.mxu0 0.0
  %1403 = vmatpush1.msra.mxu0 0.0
  %1404 = vmatprep.mubr.f32.mxu0 0.0
  %1405 = vmatmul.mubr.f32.gmra.mrb[0].mxu0 %v1321
  %v1406 = vpop.f32.mrb[0].mxu0
  %v1407 = vadd.f32 0.0, %v1406
  %v1408 = vpop.f32.mrb[0].mxu0
  %1409 = vmatprep.mubr.f32.mxu0 0.0
  %1410 = vmatmul.mubr.f32.gmra.mrb[0].mxu0 %v1322
  %v1411 = vpop.f32.mrb[0].mxu0
  %v1412 = vadd.f32 0.0, %v1411
  %v1413 = vpop.f32.mrb[0].mxu0
  %1414 = vdwg.mxu0
  %1415 = vmatprep.subr.mxu0 0.0
  %1416 = vmatpush1.msra.mxu0 %v1305
  %1417 = vmatprep.subr.mxu0 0.0
  %1418 = vmatpush1.msra.mxu0 %v1306
  %1419 = vmatprep.subr.mxu0 0.0
  %1420 = vmatpush1.msra.mxu0 %v1307
  %1421 = vmatprep.subr.mxu0 0.0
  %1422 = vmatpush1.msra.mxu0 %v1308
  %1423 = vmatprep.subr.mxu0 0.0
  %1424 = vmatpush1.msra.mxu0 %v1309
  %1425 = vmatprep.subr.mxu0 0.0
  %1426 = vmatpush1.msra.mxu0 %v1310
  %1427 = vmatprep.subr.mxu0 0.0
  %1428 = vmatpush1.msra.mxu0 %v1311
  %1429 = vmatprep.subr.mxu0 0.0
  %1430 = vmatpush1.msra.mxu0 %v1312
  %1431 = vmatprep.subr.mxu0 0.0
  %1432 = vmatpush1.msra.mxu0 %v1313
  %1433 = vmatprep.subr.mxu0 0.0
  %1434 = vmatpush1.msra.mxu0 %v1314
  %1435 = vmatprep.subr.mxu0 0.0
  %1436 = vmatpush1.msra.mxu0 %v1315
  %1437 = vmatprep.subr.mxu0 0.0
  %1438 = vmatpush1.msra.mxu0 %v1316
  %1439 = vmatprep.subr.mxu0 0.0
  %1440 = vmatpush1.msra.mxu0 %v1317
  %1441 = vmatprep.subr.mxu0 0.0
  %1442 = vmatpush1.msra.mxu0 %v1318
  %1443 = vmatprep.subr.mxu0 0.0
  %1444 = vmatpush1.msra.mxu0 %v1319
  %1445 = vmatprep.subr.mxu0 0.0
  %1446 = vmatpush1.msra.mxu0 %v1320
  %1447 = vmatprep.subr.mxu0 0.0
  %1448 = vmatpush1.msra.mxu0 0.0
  %1449 = vmatprep.subr.mxu0 0.0
  %1450 = vmatpush1.msra.mxu0 0.0
  %1451 = vmatprep.subr.mxu0 0.0
  %1452 = vmatpush1.msra.mxu0 0.0
  %1453 = vmatprep.subr.mxu0 0.0
  %1454 = vmatpush1.msra.mxu0 0.0
  %1455 = vmatprep.subr.mxu0 0.0
  %1456 = vmatpush1.msra.mxu0 0.0
  %1457 = vmatprep.subr.mxu0 0.0
  %1458 = vmatpush1.msra.mxu0 0.0
  %1459 = vmatprep.subr.mxu0 0.0
  %1460 = vmatpush1.msra.mxu0 0.0
  %1461 = vmatprep.subr.mxu0 0.0
  %1462 = vmatpush1.msra.mxu0 0.0
  %1463 = vmatprep.subr.mxu0 0.0
  %1464 = vmatpush1.msra.mxu0 0.0
  %1465 = vmatprep.subr.mxu0 0.0
  %1466 = vmatpush1.msra.mxu0 0.0
  %1467 = vmatprep.subr.mxu0 0.0
  %1468 = vmatpush1.msra.mxu0 0.0
  %1469 = vmatprep.subr.mxu0 0.0
  %1470 = vmatpush1.msra.mxu0 0.0
  %1471 = vmatprep.subr.mxu0 0.0
  %1472 = vmatpush1.msra.mxu0 0.0
  %1473 = vmatprep.subr.mxu0 0.0
  %1474 = vmatpush1.msra.mxu0 0.0
  %1475 = vmatprep.subr.mxu0 0.0
  %1476 = vmatpush1.msra.mxu0 0.0
  %1477 = vmatprep.subr.mxu0 0.0
  %1478 = vmatpush1.msra.mxu0 0.0
  %1479 = vmatprep.mubr.f32.mxu0 0.0
  %1480 = vmatmul.mubr.f32.gmra.mrb[0].mxu0 %v1302
  %v1481 = vpop.f32.mrb[0].mxu0
  %v1482 = vadd.f32 %v1407, %v1481
  %v1483 = vpop.f32.mrb[0].mxu0
  %1484 = vmatprep.mubr.f32.mxu0 0.0
  %1485 = vmatmul.mubr.f32.gmra.mrb[0].mxu0 %v1303
  %v1486 = vpop.f32.mrb[0].mxu0
  %v1487 = vadd.f32 %v1412, %v1486
  %v1488 = vpop.f32.mrb[0].mxu0
  %1489 = vdwg.mxu0
  %v1490 = vmul.f32 %v1202, %v1202
  %v1491 = vmul.f32 %v1207, %v1207
  %v1492 = vmul.f32 %v1294, %v1294
  %v1493 = vmul.f32 %v1299, %v1299
  %v1494 = vadd.f32 %v1490, %v1492
  %v1495 = vadd.f32 %v1491, %v1493
  %v1496 = vsub.f32 %v1494, %v1482
  %v1497 = vsub.f32 %v1495, %v1487
  %v1498 = vmul.f32 %v1496, 0.5
  %v1499 = vmul.f32 %v1497, 0.5
  %1501 = vset.pattern.permute.xlu0 0
  %1502 = vperm.xlu0 %1501, %v33
  %v1503 = vpop.permute.xlu0 %1502
  %1506 = vset.pattern.permute.xlu0 0
  %1507 = vperm.xlu0 %1506, %v34
  %v1508 = vpop.permute.xlu0 %1507
  %v1510 = vlaneseq
  %v1511 = vshrl.u32 %v1510, 7
  %v1512 = vsub.s32 2, %v1511
  %v1513 = vrot.slane %v35, %v1512
  %v1514 = vmul.f32 %v1503, %v1513
  %v1515 = vmul.f32 %v1508, %v1513
  %1516 = vset.pattern.permute.xlu0 1
  %1517 = vperm.xlu0 %1516, %v33
  %v1518 = vpop.permute.xlu0 %1517
  %1520 = vset.pattern.permute.xlu0 1
  %1521 = vperm.xlu0 %1520, %v34
  %v1522 = vpop.permute.xlu0 %1521
  %v1524 = vlaneseq
  %v1525 = vshrl.u32 %v1524, 7
  %v1526 = vsub.s32 3, %v1525
  %v1527 = vrot.slane %v35, %v1526
  %v1528 = vmul.f32 %v1518, %v1527
  %v1529 = vmul.f32 %v1522, %v1527
  %v1530 = vlaneseq
  %v1531 = vshrl.u32 %v1530, 7
  %v1532 = vsub.s32 4, %v1531
  %v1533 = vrot.slane %v35, %v1532
  %1535 = vset.pattern.permute.xlu0 64
  %1536 = vperm.xlu0 %1535, %v1202
  %v1537 = vpop.permute.xlu0 %1536
  %1540 = vset.pattern.permute.xlu0 64
  %1541 = vperm.xlu0 %1540, %v1207
  %v1542 = vpop.permute.xlu0 %1541
  %v1544 = vmul.f32 %v1533, %v1537
  %v1545 = vmul.f32 %v1533, %v1542
  %v1546 = vlaneseq
  %v1547 = vshrl.u32 %v1546, 7
  %v1548 = vsub.s32 5, %v1547
  %v1549 = vrot.slane %v35, %v1548
  %1551 = vset.pattern.permute.xlu0 64
  %1552 = vperm.xlu0 %1551, %v1294
  %v1553 = vpop.permute.xlu0 %1552
  %1556 = vset.pattern.permute.xlu0 64
  %1557 = vperm.xlu0 %1556, %v1299
  %v1558 = vpop.permute.xlu0 %1557
  %v1560 = vmul.f32 %v1549, %v1553
  %v1561 = vmul.f32 %v1549, %v1558
  %v1562 = vlaneseq
  %v1563 = vshrl.u32 %v1562, 7
  %v1564 = vsub.s32 6, %v1563
  %v1565 = vrot.slane %v35, %v1564
  %v1566 = vmul.f32 %v1565, %v1503
  %v1567 = vmul.f32 %v1565, %v1508
  %v1568 = vlaneseq
  %v1569 = vshrl.u32 %v1568, 7
  %v1570 = vsub.s32 7, %v1569
  %v1571 = vrot.slane %v35, %v1570
  %v1572 = vmul.f32 %v1571, %v1518
  %v1573 = vmul.f32 %v1571, %v1522
  %v1574 = vadd.f32 %v1544, %v1560
  %v1575 = vadd.f32 %v1545, %v1561
  %v1576 = vadd.f32 %v1574, %v1566
  %v1577 = vadd.f32 %v1575, %v1567
  %v1578 = vadd.f32 %v1576, %v1572
  %v1579 = vadd.f32 %v1577, %v1573
  %v1580 = vadd.f32 %v1202, %v1294
  %v1581 = vadd.f32 %v1207, %v1299
  %v1582 = vadd.f32 %v1580, %v1514
  %v1583 = vadd.f32 %v1581, %v1515
  %v1584 = vadd.f32 %v1582, %v1528
  %v1585 = vadd.f32 %v1583, %v1529
  %v1586 = vmul.f32 %v1202, %v1544
  %v1587 = vmul.f32 %v1207, %v1545
  %v1588 = vmul.f32 %v1294, %v1560
  %v1589 = vmul.f32 %v1299, %v1561
  %v1590 = vadd.f32 %v1586, %v1588
  %v1591 = vadd.f32 %v1587, %v1589
  %v1592 = vmul.f32 %v1514, %v1566
  %v1593 = vmul.f32 %v1515, %v1567
  %v1594 = vadd.f32 %v1590, %v1592
  %v1595 = vadd.f32 %v1591, %v1593
  %v1596 = vmul.f32 %v1528, %v1572
  %v1597 = vmul.f32 %v1529, %v1573
  %v1598 = vadd.f32 %v1594, %v1596
  %v1599 = vadd.f32 %v1595, %v1597
  %v1600 = vmul.f32 %v1584, %v1578
  %v1601 = vmul.f32 %v1585, %v1579
  %v1602 = vadd.f32 %v1498, %v1600
  %v1603 = vadd.f32 %v1499, %v1601
  %v1604 = vsub.f32 %v1602, %v1598
  %v1605 = vsub.f32 %v1603, %v1599
  %v1606 = vadd.f32 %v571, %v1113
  %v1607 = vadd.f32 %v574, %v1116
  %1609 = vrot.lane.b32.xlu0 %v1565, 64
  %v1610 = vpop.permute.xlu0 %1609
  %v1612 = vmul.f32 %v33, %v1610
  %v1613 = vmul.f32 %v34, %v1610
  %1616 = vrot.lane.b32.xlu0 %v1612, 64
  %v1617 = vpop.permute.xlu0 %1616
  %1618 = vrot.lane.b32.xlu0 %v1613, 64
  %v1619 = vpop.permute.xlu0 %1618
  %v1622 = vadd.f32 %v1606, %v1617
  %v1623 = vadd.f32 %v1607, %v1619
  %1625 = vrot.lane.b32.xlu0 %v1571, 65
  %v1626 = vpop.permute.xlu0 %1625
  %v1628 = vmul.f32 %v33, %v1626
  %v1629 = vmul.f32 %v34, %v1626
  %1632 = vrot.lane.b32.xlu0 %v1628, 63
  %v1633 = vpop.permute.xlu0 %1632
  %1634 = vrot.lane.b32.xlu0 %v1629, 63
  %v1635 = vpop.permute.xlu0 %1634
  %v1638 = vadd.f32 %v1622, %v1633
  %v1639 = vadd.f32 %v1623, %v1635
  %1641 = vset.pattern.permute.xlu0 64
  %1642 = vperm.xlu0 %1641, %v1638
  %v1643 = vpop.permute.xlu0 %1642
  %1646 = vset.pattern.permute.xlu0 64
  %1647 = vperm.xlu0 %1646, %v1639
  %v1648 = vpop.permute.xlu0 %1647
  %vm1650 = vcmask 523264
  %v1651 = vsel %vm1650, %v1604, %v1643
  %v1652 = vsel %vm1650, %v1605, %v1648
  %1653 = vst [vmem:[%s5] sm:$0xff] %v1651
  %1654 = vst [vmem:[%s5 + $0x8] sm:$0xff] %v1652
  // Predicated region
  $region22: #{sanfm_forward.2} parent=0 // pred_check
    _
  $region23: #{sanfm_forward.2} parent=0 // pred_check_branch
    %1656 = sbr.rel (0) target = $region25
  $region24: #{sanfm_forward.2} parent=0 // pred_region
    _
  $region25: #{sanfm_forward.2} parent=0 // pred_fallthru
    _
  // Predicated region
  $region26: #{sanfm_forward.2} parent=0 // pred_check
    _
  $region27: #{sanfm_forward.2} parent=0 // pred_check_branch
    %1658 = sbr.rel (0) target = $region29
  $region28: #{sanfm_forward.2} parent=0 // pred_region
    _
  $region29: #{sanfm_forward.2} parent=0 // pred_fallthru
    _

</llo_original>
